<compile_context>
chip_gen: v7x
topology: tpu7x:2x2x1
jax: 0.10.0
libtpu: 0.0.40
codegen_flags: <defaults>
</compile_context>

<pallas_src>
import math
import numpy as np
import jax
import jax.numpy as jnp
from jax.experimental import pallas as pl
from jax.experimental.pallas import tpu as pltpu


def _round_up(x, m):
    return ((x + m - 1) // m) * m


def _cdiv(a, b):
    return -(-a // b)


def _vmem_limit_bytes():
    """Generation-aware scoped-VMEM limit (~75% of physical, clamped)."""
    phys = None
    try:
        info = pltpu.get_tpu_info()
        phys = int(getattr(info, "vmem_capacity_bytes", 0)) or None
    except Exception:
        phys = None
    if phys is None:
        phys = 64 * 1024 * 1024  # conservative default (v7x per-core VMEM)
    limit = (phys * 3) // 4
    return max(32 * 1024 * 1024, min(limit, 112 * 1024 * 1024))


def _make_dht_kernel(use_scratch):
    def kernel(rho_ref, feat_ref, out_ref, *scratch_refs):
        # rho_ref : (TILE_HW, G) int32   rho-bin per pixel for this angle group
        # feat_ref: (TILE_NC, TILE_HW)   feature tile (channels x pixels)
        # out_ref : (G, TILE_NC, R_pad)  output block (resident across hw tiles)
        acc_ref = scratch_refs[0] if use_scratch else out_ref
        h = pl.program_id(2)

        @pl.when(h == 0)
        def _init():
            acc_ref[...] = jnp.zeros_like(acc_ref)

        g_per_step = out_ref.shape[0]
        r_pad = out_ref.shape[2]
        tile_hw = feat_ref.shape[1]

        feat = feat_ref[...]
        rho = rho_ref[...]
        # rho-bin iota built once at tile size, shared across the G angles.
        iota = jax.lax.broadcasted_iota(jnp.int32, (tile_hw, r_pad), 1)
        for g in range(g_per_step):
            # One-hot vote matrix for angle g; padding rho values (-1) and
            # out-of-range bins match no column and contribute nothing.
            onehot = (iota == rho[:, g:g + 1]).astype(feat.dtype)
            acc_ref[g] += jnp.dot(feat, onehot,
                                  preferred_element_type=jnp.float32)

        if use_scratch:
            @pl.when(h == pl.num_programs(2) - 1)
            def _finalize():
                out_ref[...] = acc_ref[...].astype(out_ref.dtype)

    return kernel


def _select_tiling(NC, HW, num_angle, r_pad, in_itemsize, out_is_f32, budget):
    """Pick (TILE_NC, G, n_groups, TILE_HW) to fill the VMEM budget."""
    out_isz = in_itemsize

    def out_block_bytes(g, tnc):
        b = 2 * g * tnc * r_pad * out_isz            # double-buffered output block
        if not out_is_f32:
            b += g * tnc * r_pad * 4                 # f32 scratch accumulator
        return b

    # --- channel tile ---------------------------------------------------
    tile_nc = min(_round_up(NC, 8), 1024)
    while tile_nc > 8 and out_block_bytes(1, tile_nc) > budget // 2:
        tile_nc = _round_up(tile_nc // 2, 8)

    # --- angles per grid step (amortizes feature re-streaming) -----------
    g_max = min(num_angle, 32)
    while g_max > 1 and out_block_bytes(g_max, tile_nc) > budget // 2:
        g_max -= 1
    n_groups = _cdiv(num_angle, g_max)
    if num_angle >= 2:
        n_groups = max(n_groups, 2)  # >=2 parallel angle groups for dual-TC chips
    g = _cdiv(num_angle, n_groups)   # minimizes angle padding for this group count

    # --- pixel tile from the remaining budget ----------------------------
    per_px = (2 * tile_nc * in_itemsize   # double-buffered feature tile
              + 2 * g * 4                 # double-buffered rho tile
              + g * r_pad * in_itemsize)  # worst-case live one-hot temporaries
    rem = budget - out_block_bytes(g, tile_nc)
    tile_hw = max(128, (rem // per_px) // 128 * 128)
    tile_hw = min(tile_hw, _round_up(HW, 128))
    return tile_nc, g, n_groups, tile_hw


def _compute_rho_table(H, W, numangle, numrho):
    """Integer rho-bin index for each (angle, pixel). Tiny host-side table."""
    denom = max(numrho - 1, 1)   # guard numrho == 1
    irho = float(int(math.sqrt(H * H + W * W) + 1)) / float(denom)
    itheta = math.pi / numangle
    angles = jnp.arange(numangle, dtype=jnp.float32) * jnp.float32(itheta)
    tab_cos = jnp.cos(angles) / jnp.float32(irho)   # (A,)
    tab_sin = jnp.sin(angles) / jnp.float32(irho)   # (A,)

    ys, xs = jnp.meshgrid(jnp.arange(H), jnp.arange(W), indexing="ij")
    xx = (xs - W // 2).astype(jnp.float32).reshape(-1)   # (HW,), p = y*W + x
    yy = (ys - H // 2).astype(jnp.float32).reshape(-1)

    v = tab_cos[:, None] * xx[None, :] + tab_sin[:, None] * yy[None, :]   # (A, HW)
    # std::round (half away from zero), unlike jnp.round (half to even)
    r = jnp.where(v >= 0.0, jnp.floor(v + 0.5), jnp.ceil(v - 0.5)).astype(jnp.int32)
    return r + numrho // 2   # (A, HW)


def deep_hough_forward(feat, num_angle, num_rho):
    """feat: (N, C, H, W) -> out: (N, C, num_angle, num_rho)."""
    N, C, H, W = feat.shape
    NC, HW = N * C, H * W
    in_dtype = feat.dtype
    isz = np.dtype(in_dtype).itemsize
    out_is_f32 = np.dtype(in_dtype) == np.float32
    r_pad = _round_up(num_rho, 128)    # lane-dense output / MXU column tiles

    vmem_limit = _vmem_limit_bytes()
    budget = (vmem_limit * 17) // 20   # ~85% of the limit for our blocks

    tile_nc, G, n_groups, tile_hw = _select_tiling(
        NC, HW, num_angle, r_pad, isz, out_is_f32, budget)

    A_pad = n_groups * G
    NC_pad = _round_up(NC, tile_nc)
    HW_pad = _round_up(HW, tile_hw)

    # --- rho-bin table grouped as (n_groups, HW_pad, G) ----------------------
    rho = _compute_rho_table(H, W, num_angle, num_rho)             # (A, HW)
    rho = jnp.pad(rho, ((0, A_pad - num_angle), (0, HW_pad - HW)),
                  constant_values=-1)                              # never matches
    rho_g = jnp.transpose(rho.reshape(n_groups, G, HW_pad), (0, 2, 1))

    # --- features as (NC_pad, HW_pad): a free reshape of contiguous NCHW -----
    feat2d = feat.reshape(NC, HW)
    if NC_pad != NC or HW_pad != HW:
        feat2d = jnp.pad(feat2d, ((0, NC_pad - NC), (0, HW_pad - HW)))

    grid = (NC_pad // tile_nc, n_groups, HW_pad // tile_hw)

    cost = pl.CostEstimate(
        flops=2 * A_pad * r_pad * HW_pad * NC_pad,
        transcendentals=0,
        bytes_accessed=(n_groups * NC_pad * HW_pad * isz   # feat re-read per group
                        + grid[0] * A_pad * HW_pad * 4     # rho table per nc tile
                        + A_pad * NC_pad * r_pad * isz),   # output
    )

    scratch_shapes = ([] if out_is_f32
                      else [pltpu.VMEM((G, tile_nc, r_pad), jnp.float32)])

    out = pl.pallas_call(
        _make_dht_kernel(use_scratch=not out_is_f32),
        out_shape=jax.ShapeDtypeStruct((A_pad, NC_pad, r_pad), in_dtype),
        grid=grid,
        in_specs=[
            # only the (TILE_HW, G) slice of the rho table for this step
            pl.BlockSpec((None, tile_hw, G), lambda c, a, h: (a, h, 0)),
            # feature tile: TILE_NC channels, TILE_HW pixels
            pl.BlockSpec((tile_nc, tile_hw), lambda c, a, h: (c, h)),
        ],
        out_specs=pl.BlockSpec((G, tile_nc, r_pad), lambda c, a, h: (a, c, 0)),
        scratch_shapes=scratch_shapes,
        compiler_params=pltpu.CompilerParams(
            dimension_semantics=("parallel", "parallel", "arbitrary"),
            vmem_limit_bytes=int(vmem_limit),
        ),
        cost_estimate=cost,
    )(rho_g, feat2d)

    # drop angle/channel/rho padding, then (A, N, C, R) -> (N, C, A, R)
    out = out[:num_angle, :NC, :num_rho].reshape(num_angle, N, C, num_rho)
    return jnp.transpose(out, (1, 2, 0, 3))


class DeepHough:
    """JAX/Pallas port of the PyTorch DeepHough module (forward only)."""

    def __init__(self, num_angle, num_bias):
        self.num_angle = num_angle
        self.num_bias = num_bias  # num_bias == numrho

    def __call__(self, feat):
        return deep_hough_forward(feat, self.num_angle, self.num_bias)


def _reference(feat, num_angle, num_rho):
    """Pure-JAX scatter-add reference for correctness checking."""
    N, C, H, W = feat.shape
    rho_idx = _compute_rho_table(H, W, num_angle, num_rho)           # (A, HW)
    feat_p = jnp.transpose(feat, (2, 3, 0, 1)).reshape(H * W, N, C)  # (HW, N, C)
    ref = jnp.zeros((N, C, num_angle, num_rho), dtype=feat.dtype)
    for k in range(num_angle):
        seg = jax.ops.segment_sum(feat_p, rho_idx[k], num_segments=num_rho)
        ref = ref.at[:, :, k, :].set(jnp.transpose(seg, (1, 2, 0)))
    return ref


if __name__ == "__main__":
    key = jax.random.PRNGKey(0)
    N, C, H, W = 2, 4, 16, 16
    num_angle, num_rho = 8, 16

    feat = jax.random.normal(key, (N, C, H, W), dtype=jnp.float32)

    module = DeepHough(num_angle, num_rho)
    out = module(feat)
    out = jax.block_until_ready(out)

    assert out.shape == (N, C, num_angle, num_rho), out.shape

    ref = _reference(feat, num_angle, num_rho)
    np.testing.assert_allclose(np.asarray(out), np.asarray(ref), rtol=1e-5, atol=1e-5)

    print("KERNEL_OK")
</pallas_src>

<mosaic_0001>
module attributes {stable_mosaic.version = 11 : i64} {
  func.func @kernel(%arg0: i32, %arg1: i32, %arg2: i32, %arg3: memref<1x256x4xi32, #tpu.memory_space<vmem>>, %arg4: memref<8x256xf32, #tpu.memory_space<vmem>>, %arg5: memref<4x8x128xf32, #tpu.memory_space<vmem>>) attributes {dimension_semantics = [#tpu.dimension_semantics<parallel>, #tpu.dimension_semantics<parallel>, #tpu.dimension_semantics<arbitrary>], iteration_bounds = array<i64: 1, 2, 1>, scalar_prefetch = 0 : i64, scratch_operands = 0 : i64, tpu.core_type = #tpu.core_type<tc>, window_params = [{transform_indices = @transform_0, window_bounds = array<i64: 1, 256, 4>}, {transform_indices = @transform_1, window_bounds = array<i64: 8, 256>}, {transform_indices = @transform_2, window_bounds = array<i64: 4, 8, 128>}]} {
    %c0_i32 = arith.constant 0 : i32
    %0 = arith.cmpi eq, %arg2, %c0_i32 : i32
    %1 = arith.extui %0 : i1 to i32
    %c0_i32_0 = arith.constant 0 : i32
    %2 = arith.cmpi ne, %1, %c0_i32_0 : i32
    scf.if %2 {
      %cst_29 = arith.constant 0.000000e+00 : f32
      %55 = vector.broadcast %cst_29 : f32 to vector<4x8x128xf32>
      %c0_30 = arith.constant 0 : index
      %c0_31 = arith.constant 0 : index
      %c0_32 = arith.constant 0 : index
      %56 = vector.load %arg5[%c0_30, %c0_31, %c0_32] : memref<4x8x128xf32, #tpu.memory_space<vmem>>, vector<4x8x128xf32>
      tpu.vector_store %arg5[%c0_30, %c0_31, %c0_32], %55 {strides = array<i32>} : memref<4x8x128xf32, #tpu.memory_space<vmem>>, vector<4x8x128xf32>,
    } else {
    }
    %c0 = arith.constant 0 : index
    %c0_1 = arith.constant 0 : index
    %3 = vector.load %arg4[%c0, %c0_1] : memref<8x256xf32, #tpu.memory_space<vmem>>, vector<8x256xf32>
    %c0_2 = arith.constant 0 : index
    %c0_3 = arith.constant 0 : index
    %c0_4 = arith.constant 0 : index
    %4 = vector.load %arg3[%c0_2, %c0_3, %c0_4] : memref<1x256x4xi32, #tpu.memory_space<vmem>>, vector<1x256x4xi32>
    %5 = vector.shape_cast %4 : vector<1x256x4xi32> to vector<256x4xi32>
    %6 = tpu.iota {dimensions = array<i32: 1>} : vector<256x128xi32>
    %7 = vector.extract_strided_slice %5 {offsets = [0, 0], sizes = [256, 1], strides = [1, 1]} : vector<256x4xi32> to vector<256x1xi32>
    %8 = vector.broadcast %7 : vector<256x1xi32> to vector<256x128xi32>
    %9 = arith.cmpi eq, %6, %8 : vector<256x128xi32>
    %10 = arith.extui %9 : vector<256x128xi1> to vector<256x128xi32>
    %11 = arith.sitofp %10 : vector<256x128xi32> to vector<256x128xf32>
    %c0_5 = arith.constant 0 : index
    %c0_6 = arith.constant 0 : index
    %c0_7 = arith.constant 0 : index
    %12 = vector.load %arg5[%c0_5, %c0_6, %c0_7] : memref<4x8x128xf32, #tpu.memory_space<vmem>>, vector<1x8x128xf32>
    %13 = vector.shape_cast %12 : vector<1x8x128xf32> to vector<8x128xf32>
    %cst = arith.constant dense<0.000000e+00> : vector<8x128xf32>
    %14 = tpu.matmul %3, %11, %cst {dimension_numbers = #tpu.dot_dimension_numbers<[1], [0], [0], [1], [0, 0, 1, 1], [], []>} : vector<8x256xf32>, vector<256x128xf32>, vector<8x128xf32> -> vector<8x128xf32>
    %15 = arith.addf %13, %14 : vector<8x128xf32>
    %c0_8 = arith.constant 0 : index
    %c0_9 = arith.constant 0 : index
    %c0_10 = arith.constant 0 : index
    %16 = vector.load %arg5[%c0_8, %c0_9, %c0_10] : memref<4x8x128xf32, #tpu.memory_space<vmem>>, vector<1x8x128xf32>
    %17 = vector.shape_cast %16 : vector<1x8x128xf32> to vector<8x128xf32>
    %18 = vector.shape_cast %15 : vector<8x128xf32> to vector<1x8x128xf32>
    tpu.vector_store %arg5[%c0_8, %c0_9, %c0_10], %18 {strides = array<i32>} : memref<4x8x128xf32, #tpu.memory_space<vmem>>, vector<1x8x128xf32>,
    %19 = vector.extract_strided_slice %5 {offsets = [0, 1], sizes = [256, 1], strides = [1, 1]} : vector<256x4xi32> to vector<256x1xi32>
    %20 = vector.broadcast %19 : vector<256x1xi32> to vector<256x128xi32>
    %21 = arith.cmpi eq, %6, %20 : vector<256x128xi32>
    %22 = arith.extui %21 : vector<256x128xi1> to vector<256x128xi32>
    %23 = arith.sitofp %22 : vector<256x128xi32> to vector<256x128xf32>
    %c1 = arith.constant 1 : index
    %c0_11 = arith.constant 0 : index
    %c0_12 = arith.constant 0 : index
    %24 = vector.load %arg5[%c1, %c0_11, %c0_12] : memref<4x8x128xf32, #tpu.memory_space<vmem>>, vector<1x8x128xf32>
    %25 = vector.shape_cast %24 : vector<1x8x128xf32> to vector<8x128xf32>
    %cst_13 = arith.constant dense<0.000000e+00> : vector<8x128xf32>
    %26 = tpu.matmul %3, %23, %cst_13 {dimension_numbers = #tpu.dot_dimension_numbers<[1], [0], [0], [1], [0, 0, 1, 1], [], []>} : vector<8x256xf32>, vector<256x128xf32>, vector<8x128xf32> -> vector<8x128xf32>
    %27 = arith.addf %25, %26 : vector<8x128xf32>
    %c1_14 = arith.constant 1 : index
    %c0_15 = arith.constant 0 : index
    %c0_16 = arith.constant 0 : index
    %28 = vector.load %arg5[%c1_14, %c0_15, %c0_16] : memref<4x8x128xf32, #tpu.memory_space<vmem>>, vector<1x8x128xf32>
    %29 = vector.shape_cast %28 : vector<1x8x128xf32> to vector<8x128xf32>
    %30 = vector.shape_cast %27 : vector<8x128xf32> to vector<1x8x128xf32>
    tpu.vector_store %arg5[%c1_14, %c0_15, %c0_16], %30 {strides = array<i32>} : memref<4x8x128xf32, #tpu.memory_space<vmem>>, vector<1x8x128xf32>,
    %31 = vector.extract_strided_slice %5 {offsets = [0, 2], sizes = [256, 1], strides = [1, 1]} : vector<256x4xi32> to vector<256x1xi32>
    %32 = vector.broadcast %31 : vector<256x1xi32> to vector<256x128xi32>
    %33 = arith.cmpi eq, %6, %32 : vector<256x128xi32>
    %34 = arith.extui %33 : vector<256x128xi1> to vector<256x128xi32>
    %35 = arith.sitofp %34 : vector<256x128xi32> to vector<256x128xf32>
    %c2 = arith.constant 2 : index
    %c0_17 = arith.constant 0 : index
    %c0_18 = arith.constant 0 : index
    %36 = vector.load %arg5[%c2, %c0_17, %c0_18] : memref<4x8x128xf32, #tpu.memory_space<vmem>>, vector<1x8x128xf32>
    %37 = vector.shape_cast %36 : vector<1x8x128xf32> to vector<8x128xf32>
    %cst_19 = arith.constant dense<0.000000e+00> : vector<8x128xf32>
    %38 = tpu.matmul %3, %35, %cst_19 {dimension_numbers = #tpu.dot_dimension_numbers<[1], [0], [0], [1], [0, 0, 1, 1], [], []>} : vector<8x256xf32>, vector<256x128xf32>, vector<8x128xf32> -> vector<8x128xf32>
    %39 = arith.addf %37, %38 : vector<8x128xf32>
    %c2_20 = arith.constant 2 : index
    %c0_21 = arith.constant 0 : index
    %c0_22 = arith.constant 0 : index
    %40 = vector.load %arg5[%c2_20, %c0_21, %c0_22] : memref<4x8x128xf32, #tpu.memory_space<vmem>>, vector<1x8x128xf32>
    %41 = vector.shape_cast %40 : vector<1x8x128xf32> to vector<8x128xf32>
    %42 = vector.shape_cast %39 : vector<8x128xf32> to vector<1x8x128xf32>
    tpu.vector_store %arg5[%c2_20, %c0_21, %c0_22], %42 {strides = array<i32>} : memref<4x8x128xf32, #tpu.memory_space<vmem>>, vector<1x8x128xf32>,
    %43 = vector.extract_strided_slice %5 {offsets = [0, 3], sizes = [256, 1], strides = [1, 1]} : vector<256x4xi32> to vector<256x1xi32>
    %44 = vector.broadcast %43 : vector<256x1xi32> to vector<256x128xi32>
    %45 = arith.cmpi eq, %6, %44 : vector<256x128xi32>
    %46 = arith.extui %45 : vector<256x128xi1> to vector<256x128xi32>
    %47 = arith.sitofp %46 : vector<256x128xi32> to vector<256x128xf32>
    %c3 = arith.constant 3 : index
    %c0_23 = arith.constant 0 : index
    %c0_24 = arith.constant 0 : index
    %48 = vector.load %arg5[%c3, %c0_23, %c0_24] : memref<4x8x128xf32, #tpu.memory_space<vmem>>, vector<1x8x128xf32>
    %49 = vector.shape_cast %48 : vector<1x8x128xf32> to vector<8x128xf32>
    %cst_25 = arith.constant dense<0.000000e+00> : vector<8x128xf32>
    %50 = tpu.matmul %3, %47, %cst_25 {dimension_numbers = #tpu.dot_dimension_numbers<[1], [0], [0], [1], [0, 0, 1, 1], [], []>} : vector<8x256xf32>, vector<256x128xf32>, vector<8x128xf32> -> vector<8x128xf32>
    %51 = arith.addf %49, %50 : vector<8x128xf32>
    %c3_26 = arith.constant 3 : index
    %c0_27 = arith.constant 0 : index
    %c0_28 = arith.constant 0 : index
    %52 = vector.load %arg5[%c3_26, %c0_27, %c0_28] : memref<4x8x128xf32, #tpu.memory_space<vmem>>, vector<1x8x128xf32>
    %53 = vector.shape_cast %52 : vector<1x8x128xf32> to vector<8x128xf32>
    %54 = vector.shape_cast %51 : vector<8x128xf32> to vector<1x8x128xf32>
    tpu.vector_store %arg5[%c3_26, %c0_27, %c0_28], %54 {strides = array<i32>} : memref<4x8x128xf32, #tpu.memory_space<vmem>>, vector<1x8x128xf32>,
    return
  }
  func.func @transform_0(%arg0: i32, %arg1: i32, %arg2: i32) -> (i32, i32, i32) {
    %c0_i32 = arith.constant 0 : i32
    %c0_i32_0 = arith.constant 0 : i32
    return %arg1, %arg2, %c0_i32 : i32, i32, i32
  }
  func.func @transform_1(%arg0: i32, %arg1: i32, %arg2: i32) -> (i32, i32) {
    %c0_i32 = arith.constant 0 : i32
    return %arg0, %arg2 : i32, i32
  }
  func.func @transform_2(%arg0: i32, %arg1: i32, %arg2: i32) -> (i32, i32, i32) {
    %c0_i32 = arith.constant 0 : i32
    %c0_i32_0 = arith.constant 0 : i32
    return %arg1, %arg0, %c0_i32 : i32, i32, i32
  }
}

</mosaic_0001>

<llo_original>
// kernel: tpu_custom_call.1
$region0: #{tpu_custom_call.1}
  #allocation0 [shape = 'u32[]', space=smem, size = 0x4, offset = 0x4, fixed_abs, tag = 'smem constant byte address 0x4 - core index']
  #allocation1 [shape = 'u32[144,128]{1,0:T(1,128)}', space=vmem, size = 0x12000, scoped, tag = 'internal scratch']
  %s0 = inlined_call_operand.vmem [shape: s32[2,256,4], index: 0, kind: input, shape index: {}]
  %s1 = inlined_call_operand.vmem [shape: f32[8,256], index: 1, kind: input, shape index: {}]
  %s2 = inlined_call_operand.hbm [shape: f32[8,8,128], index: 2, kind: output, shape index: {}]
  %s3 = sld [smem:[#allocation0]]
  $region45: #{tpu_custom_call.1} parent=0
    _
  %s5 = ssub.s32 1, %s3
  %s6 = scalar_select 0, %s5, %s3
  $region1: #{tpu_custom_call.1} parent=0
    #allocation2 [shape = 'u8[32768]{0}', space=vmem, size = 0x8000, scoped, tag = 'output window, operand 0']
    #allocation3 [shape = 's32[2]{0}', space=sflag, size = 0x8, scoped, tag = 'scoped memory for tpu_custom_call.1']
    %7 = vsyncpa [#allocation3], 0
    %s8 = scalar_lea.sflag [#allocation3], 1
    %9 = vsyncpa %s8, 0
    loop: start=0, step=1, limit=4
    $region2: #{tpu_custom_call.1} parent=1 // loop_pre_header
      _
    $region3: #{tpu_custom_call.1} parent=1 // loop_header
      %s11 = sphi 0, %s15
      %p12 = scmp.ge.s32.totalorder %s11, 4
      %s18 = sphi 0, %s37
      %s19 = sphi 0, %s33
      %s20 = sphi 0, %s29
      %s21 = sphi 0, %s18
      %s22 = sphi 0, %s19
      %s23 = sphi 0, %s20
      %s24 = sphi 0, %s21
      %s25 = sphi 0, %s22
      %s26 = sphi 0, %s23
      %s42 = sphi 0, %s44
      %s45 = sphi 0, %s42
      %s46 = sphi 0, %s45
      %s62 = sphi 0, %s46
      %s70 = sphi 0, %s72
      %s73 = sphi 0, %s70
      %s74 = sphi 0, %s73
      %s90 = sphi 0, %s74
      %s98 = sphi 0, %s100
      %s101 = sphi 0, %s98
      %s102 = sphi 0, %s101
      %s118 = sphi 0, %s102
    $region4: #{tpu_custom_call.1} parent=1 // loop_header_branch
      %14 = sbr.rel (%p12) target = $region8
    $region5: #{tpu_custom_call.1} parent=1 // loop_body
      %s16 = ssub.s32 %s11, 1
      %s17 = ssub.s32 %s11, 2
      %s27 = sadd.s32 1, %s20
      %p28 = scmp.ge.s32.totalorder %s27, 1
      %s29 = scalar_select %p28, 0, %s27
      %s30 = sadd.s32 1, %s19
      %s31 = scalar_select %p28, %s30, %s19
      %p32 = scmp.ge.s32.totalorder %s31, 2
      %s33 = scalar_select %p32, 0, %s31
      %s34 = sadd.s32 1, %s18
      %s35 = scalar_select %p32, %s34, %s18
      %p36 = scmp.ge.s32.totalorder %s35, 1
      %s37 = scalar_select %p36, 0, %s35
      %s38 = ssub.s32 %s19, %s33
      %s39 = ssub.s32 %s20, %s29
      %s40 = sor.u32 %s38, %s39
      %p41 = scmp.eq.s32.totalorder %s40, 0
      %s43 = sadd.s32 %s42, 1
      %s44 = scalar_select %p41, %s42, %s43
      %p47 = pneg %p41
      %p48 = scmp.eq.s32.totalorder %s11, 1
      %p49 = por %p47, %p48
      %p50 = scmp.ne.s32.totalorder %s42, %s45
      %p51 = scmp.eq.s32.totalorder %s11, 0
      %p52 = por %p50, %p51
      %p53 = scmp.ne.s32.totalorder %s42, %s45
      %p54 = scmp.eq.s32.totalorder %s16, 1
      %p55 = por %p53, %p54
      %p56 = scmp.ne.s32.totalorder %s45, %s46
      %p57 = scmp.eq.s32.totalorder %s16, 0
      %p58 = por %p56, %p57
      %p59 = scmp.ne.s32.totalorder %s45, %s46
      %p60 = scmp.eq.s32.totalorder %s17, 1
      %p61 = por %p59, %p60
      %p63 = scmp.ne.s32.totalorder %s46, %s62
      %p64 = scmp.eq.s32.totalorder %s17, 0
      %p65 = por %p63, %p64
      %s66 = ssub.s32 %s18, %s37
      %s67 = ssub.s32 %s20, %s29
      %s68 = sor.u32 %s66, %s67
      %p69 = scmp.eq.s32.totalorder %s68, 0
      %s71 = sadd.s32 %s70, 1
      %s72 = scalar_select %p69, %s70, %s71
      %p75 = pneg %p69
      %p76 = scmp.eq.s32.totalorder %s11, 1
      %p77 = por %p75, %p76
      %p78 = scmp.ne.s32.totalorder %s70, %s73
      %p79 = scmp.eq.s32.totalorder %s11, 0
      %p80 = por %p78, %p79
      %p81 = scmp.ne.s32.totalorder %s70, %s73
      %p82 = scmp.eq.s32.totalorder %s16, 1
      %p83 = por %p81, %p82
      %p84 = scmp.ne.s32.totalorder %s73, %s74
      %p85 = scmp.eq.s32.totalorder %s16, 0
      %p86 = por %p84, %p85
      %p87 = scmp.ne.s32.totalorder %s73, %s74
      %p88 = scmp.eq.s32.totalorder %s17, 1
      %p89 = por %p87, %p88
      %p91 = scmp.ne.s32.totalorder %s74, %s90
      %p92 = scmp.eq.s32.totalorder %s17, 0
      %p93 = por %p91, %p92
      %s94 = ssub.s32 %s19, %s33
      %s95 = ssub.s32 %s18, %s37
      %s96 = sor.u32 %s94, %s95
      %p97 = scmp.eq.s32.totalorder %s96, 0
      %s99 = sadd.s32 %s98, 1
      %s100 = scalar_select %p97, %s98, %s99
      %p103 = pneg %p97
      %p104 = scmp.eq.s32.totalorder %s11, 1
      %p105 = por %p103, %p104
      %p106 = scmp.ne.s32.totalorder %s98, %s101
      %p107 = scmp.eq.s32.totalorder %s11, 0
      %p108 = por %p106, %p107
      %p109 = scmp.ne.s32.totalorder %s98, %s101
      %p110 = scmp.eq.s32.totalorder %s16, 1
      %p111 = por %p109, %p110
      %p112 = scmp.ne.s32.totalorder %s101, %s102
      %p113 = scmp.eq.s32.totalorder %s16, 0
      %p114 = por %p112, %p113
      %p115 = scmp.ne.s32.totalorder %s101, %s102
      %p116 = scmp.eq.s32.totalorder %s17, 1
      %p117 = por %p115, %p116
      %p119 = scmp.ne.s32.totalorder %s102, %s118
      %p120 = scmp.eq.s32.totalorder %s17, 0
      %p121 = por %p119, %p120
      %p122 = scmp.le.s32.totalorder 1, %s11
      %p123 = scmp.lt.s32.totalorder %s11, 3
      %p124 = pnand %p122, %p123
      %p125 = pneg %p124
      // Predicated region
      $region9: #{tpu_custom_call.1} parent=5 // pred_check
        _
      $region10: #{tpu_custom_call.1} parent=5 // pred_check_branch
        %127 = sbr.rel (%p124) target = $region12
      $region11: #{tpu_custom_call.1} parent=5 // pred_region
        %s128 = ssub.s32 %s11, 1
        // Predicated region
        $region13: #{tpu_custom_call.1} parent=11 // pred_check
          %p129 = pneg %p86
        $region14: #{tpu_custom_call.1} parent=11 // pred_check_branch
          %131 = sbr.rel (%p129) target = $region16
        $region15: #{tpu_custom_call.1} parent=11 // pred_region
          %s132 = smul.u32 2, %s23
          %p133 = scmp.lt.s32.totalorder %s21, 0
          %s134 = scalar_select %p133, %s21, 0
          %p135 = scmp.lt.s32.totalorder %s132, 1
          %s136 = scalar_select %p135, %s132, 1
          %s137 = smul.addr %s134, 2
          %s138 = sadd.s32 %s136, %s137
          %s139 = smul.addr %s138, 8
          %s140 = scalar_lea.vmem %s1, %s139
          %s141 = smul.u32 2, %s23
        $region16: #{tpu_custom_call.1} parent=11 // pred_fallthru
          _
      $region12: #{tpu_custom_call.1} parent=5 // pred_fallthru
        _
      %p142 = scmp.lt.s32.totalorder %s11, 2
      // Predicated region
      $region17: #{tpu_custom_call.1} parent=5 // pred_check
        %p143 = pneg %p142
      $region18: #{tpu_custom_call.1} parent=5 // pred_check_branch
        %145 = sbr.rel (%p143) target = $region20
      $region19: #{tpu_custom_call.1} parent=5 // pred_region
        // Predicated region
        $region21: #{tpu_custom_call.1} parent=19 // pred_check
          %p146 = pneg %p52
        $region22: #{tpu_custom_call.1} parent=19 // pred_check_branch
          %148 = sbr.rel (%p146) target = $region24
        $region23: #{tpu_custom_call.1} parent=19 // pred_region
          %s149 = smul.u32 32, %s20
          %p150 = scmp.lt.s32.totalorder %s19, 1
          %s151 = scalar_select %p150, %s19, 1
          %p152 = scmp.lt.s32.totalorder %s149, 31
          %s153 = scalar_select %p152, %s149, 31
          %s154 = smul.addr %s151, 32
          %s155 = sadd.s32 %s153, %s154
          %s156 = smul.addr %s155, 8
          %s157 = scalar_lea.vmem %s0, %s156
          %s158 = smul.u32 32, %s20
        $region24: #{tpu_custom_call.1} parent=19 // pred_fallthru
          _
      $region20: #{tpu_custom_call.1} parent=5 // pred_fallthru
        _
      %p159 = scmp.le.s32.totalorder 1, %s11
      %p160 = scmp.lt.s32.totalorder %s11, 3
      %p161 = pnand %p159, %p160
      %p162 = pneg %p161
      // Predicated region
      $region25: #{tpu_custom_call.1} parent=5 // pred_check
        _
      $region26: #{tpu_custom_call.1} parent=5 // pred_check_branch
        %164 = sbr.rel (%p161) target = $region28
      $region27: #{tpu_custom_call.1} parent=5 // pred_region
        %s165 = ssub.s32 %s11, 1
        %s166 = smul.u32 32, %s23
        %p167 = scmp.lt.s32.totalorder %s22, 1
        %s168 = scalar_select %p167, %s22, 1
        %p169 = scmp.lt.s32.totalorder %s166, 31
        %s170 = scalar_select %p169, %s166, 31
        %s171 = smul.addr %s168, 32
        %s172 = sadd.s32 %s170, %s171
        %s173 = smul.addr %s172, 8
        %s174 = scalar_lea.vmem %s0, %s173
        %p175 = pneg %p58
        %p176 = pneg %p55
        %s177 = smul.u32 2, %s23
        %p178 = scmp.lt.s32.totalorder %s21, 0
        %s179 = scalar_select %p178, %s21, 0
        %p180 = scmp.lt.s32.totalorder %s177, 1
        %s181 = scalar_select %p180, %s177, 1
        %s182 = smul.addr %s179, 2
        %s183 = sadd.s32 %s181, %s182
        %s184 = smul.addr %s183, 8
        %s185 = scalar_lea.vmem %s1, %s184
        %p186 = pneg %p86
        %p187 = pneg %p83
        %p188 = pneg %p114
        %p189 = pneg %p111
        %s190 = sand.u32 %s101, 1
        %s191 = scalar_lea.sflag [#allocation3], %s190
        %s192 = sand.u32 %s101, 1
        %s193 = smul.addr %s192, 32
        %s194 = scalar_lea.vmem [#allocation2], %s193
        %s195 = smul.u32 32, %s23
        %p196 = scmp.lt.s32.totalorder %s22, 1
        %s197 = scalar_select %p196, %s22, 1
        %p198 = scmp.lt.s32.totalorder %s195, 31
        %s199 = scalar_select %p198, %s195, 31
        %s200 = smul.addr %s197, 32
        %s201 = sadd.s32 %s199, %s200
        %s202 = smul.addr %s201, 8
        %s203 = scalar_lea.vmem %s0, %s202
        %s204 = smul.u32 32, %s23
        %s205 = smul.u32 2, %s23
        %p206 = scmp.lt.s32.totalorder %s21, 0
        %s207 = scalar_select %p206, %s21, 0
        %p208 = scmp.lt.s32.totalorder %s205, 1
        %s209 = scalar_select %p208, %s205, 1
        %s210 = smul.addr %s207, 2
        %s211 = sadd.s32 %s209, %s210
        %s212 = smul.addr %s211, 8
        %s213 = scalar_lea.vmem %s1, %s212
        %s214 = smul.u32 2, %s23
        %s215 = smul.u32 4, %s22
        %p216 = scmp.eq.s32.totalorder %s23, 0
        // Predicated region
        $region29: #{tpu_custom_call.1} parent=27 // pred_check
          %p217 = pneg %p216
        $region30: #{tpu_custom_call.1} parent=27 // pred_check_branch
          %219 = sbr.rel (%p217) target = $region32
        $region31: #{tpu_custom_call.1} parent=27 // pred_region
          %220 = vst [vmem:[%s194] sm:$0xff] 0.0
          %221 = vst [vmem:[%s194 + $0x8] sm:$0xff] 0.0
          %222 = vst [vmem:[%s194 + $0x10] sm:$0xff] 0.0
          %223 = vst [vmem:[%s194 + $0x18] sm:$0xff] 0.0
        $region32: #{tpu_custom_call.1} parent=27 // pred_fallthru
          _
        %v224 = vld [vmem:[%s213] sm:$0xff]
        %v225 = vld [vmem:[%s213 + $0x8] sm:$0xff]
        %v226 = vld [vmem:[%s203] sm:$0xff]
        %v227 = vld [vmem:[%s203 + $0x8] sm:$0xff]
        %v228 = vld [vmem:[%s203 + $0x10] sm:$0xff]
        %v229 = vld [vmem:[%s203 + $0x18] sm:$0xff]
        %v230 = vld [vmem:[%s203 + $0x20] sm:$0xff]
        %v231 = vld [vmem:[%s203 + $0x28] sm:$0xff]
        %v232 = vld [vmem:[%s203 + $0x30] sm:$0xff]
        %v233 = vld [vmem:[%s203 + $0x38] sm:$0xff]
        %v234 = vld [vmem:[%s203 + $0x40] sm:$0xff]
        %v235 = vld [vmem:[%s203 + $0x48] sm:$0xff]
        %v236 = vld [vmem:[%s203 + $0x50] sm:$0xff]
        %v237 = vld [vmem:[%s203 + $0x58] sm:$0xff]
        %v238 = vld [vmem:[%s203 + $0x60] sm:$0xff]
        %v239 = vld [vmem:[%s203 + $0x68] sm:$0xff]
        %v240 = vld [vmem:[%s203 + $0x70] sm:$0xff]
        %v241 = vld [vmem:[%s203 + $0x78] sm:$0xff]
        %v242 = vld [vmem:[%s203 + $0x80] sm:$0xff]
        %v243 = vld [vmem:[%s203 + $0x88] sm:$0xff]
        %v244 = vld [vmem:[%s203 + $0x90] sm:$0xff]
        %v245 = vld [vmem:[%s203 + $0x98] sm:$0xff]
        %v246 = vld [vmem:[%s203 + $0xa0] sm:$0xff]
        %v247 = vld [vmem:[%s203 + $0xa8] sm:$0xff]
        %v248 = vld [vmem:[%s203 + $0xb0] sm:$0xff]
        %v249 = vld [vmem:[%s203 + $0xb8] sm:$0xff]
        %v250 = vld [vmem:[%s203 + $0xc0] sm:$0xff]
        %v251 = vld [vmem:[%s203 + $0xc8] sm:$0xff]
        %v252 = vld [vmem:[%s203 + $0xd0] sm:$0xff]
        %v253 = vld [vmem:[%s203 + $0xd8] sm:$0xff]
        %v254 = vld [vmem:[%s203 + $0xe0] sm:$0xff]
        %v255 = vld [vmem:[%s203 + $0xe8] sm:$0xff]
        %v256 = vld [vmem:[%s203 + $0xf0] sm:$0xff]
        %v257 = vld [vmem:[%s203 + $0xf8] sm:$0xff]
        %v258 = vlaneseq
        %v259 = vand.u32 %v258, 127
        %260 = vset.pattern.permute.xlu0 0
        %261 = vperm.xlu0 %260, %v226
        %v262 = vpop.permute.xlu0 %261
        %263 = vset.pattern.permute.xlu0 0
        %264 = vperm.xlu0 %263, %v227
        %v265 = vpop.permute.xlu0 %264
        %266 = vset.pattern.permute.xlu0 0
        %267 = vperm.xlu0 %266, %v228
        %v268 = vpop.permute.xlu0 %267
        %269 = vset.pattern.permute.xlu0 0
        %270 = vperm.xlu0 %269, %v229
        %v271 = vpop.permute.xlu0 %270
        %272 = vset.pattern.permute.xlu0 0
        %273 = vperm.xlu0 %272, %v230
        %v274 = vpop.permute.xlu0 %273
        %275 = vset.pattern.permute.xlu0 0
        %276 = vperm.xlu0 %275, %v231
        %v277 = vpop.permute.xlu0 %276
        %278 = vset.pattern.permute.xlu0 0
        %279 = vperm.xlu0 %278, %v232
        %v280 = vpop.permute.xlu0 %279
        %281 = vset.pattern.permute.xlu0 0
        %282 = vperm.xlu0 %281, %v233
        %v283 = vpop.permute.xlu0 %282
        %284 = vset.pattern.permute.xlu0 0
        %285 = vperm.xlu0 %284, %v234
        %v286 = vpop.permute.xlu0 %285
        %287 = vset.pattern.permute.xlu0 0
        %288 = vperm.xlu0 %287, %v235
        %v289 = vpop.permute.xlu0 %288
        %290 = vset.pattern.permute.xlu0 0
        %291 = vperm.xlu0 %290, %v236
        %v292 = vpop.permute.xlu0 %291
        %293 = vset.pattern.permute.xlu0 0
        %294 = vperm.xlu0 %293, %v237
        %v295 = vpop.permute.xlu0 %294
        %296 = vset.pattern.permute.xlu0 0
        %297 = vperm.xlu0 %296, %v238
        %v298 = vpop.permute.xlu0 %297
        %299 = vset.pattern.permute.xlu0 0
        %300 = vperm.xlu0 %299, %v239
        %v301 = vpop.permute.xlu0 %300
        %302 = vset.pattern.permute.xlu0 0
        %303 = vperm.xlu0 %302, %v240
        %v304 = vpop.permute.xlu0 %303
        %305 = vset.pattern.permute.xlu0 0
        %306 = vperm.xlu0 %305, %v241
        %v307 = vpop.permute.xlu0 %306
        %308 = vset.pattern.permute.xlu0 0
        %309 = vperm.xlu0 %308, %v242
        %v310 = vpop.permute.xlu0 %309
        %311 = vset.pattern.permute.xlu0 0
        %312 = vperm.xlu0 %311, %v243
        %v313 = vpop.permute.xlu0 %312
        %314 = vset.pattern.permute.xlu0 0
        %315 = vperm.xlu0 %314, %v244
        %v316 = vpop.permute.xlu0 %315
        %317 = vset.pattern.permute.xlu0 0
        %318 = vperm.xlu0 %317, %v245
        %v319 = vpop.permute.xlu0 %318
        %320 = vset.pattern.permute.xlu0 0
        %321 = vperm.xlu0 %320, %v246
        %v322 = vpop.permute.xlu0 %321
        %323 = vset.pattern.permute.xlu0 0
        %324 = vperm.xlu0 %323, %v247
        %v325 = vpop.permute.xlu0 %324
        %326 = vset.pattern.permute.xlu0 0
        %327 = vperm.xlu0 %326, %v248
        %v328 = vpop.permute.xlu0 %327
        %329 = vset.pattern.permute.xlu0 0
        %330 = vperm.xlu0 %329, %v249
        %v331 = vpop.permute.xlu0 %330
        %332 = vset.pattern.permute.xlu0 0
        %333 = vperm.xlu0 %332, %v250
        %v334 = vpop.permute.xlu0 %333
        %335 = vset.pattern.permute.xlu0 0
        %336 = vperm.xlu0 %335, %v251
        %v337 = vpop.permute.xlu0 %336
        %338 = vset.pattern.permute.xlu0 0
        %339 = vperm.xlu0 %338, %v252
        %v340 = vpop.permute.xlu0 %339
        %341 = vset.pattern.permute.xlu0 0
        %342 = vperm.xlu0 %341, %v253
        %v343 = vpop.permute.xlu0 %342
        %344 = vset.pattern.permute.xlu0 0
        %345 = vperm.xlu0 %344, %v254
        %v346 = vpop.permute.xlu0 %345
        %347 = vset.pattern.permute.xlu0 0
        %348 = vperm.xlu0 %347, %v255
        %v349 = vpop.permute.xlu0 %348
        %350 = vset.pattern.permute.xlu0 0
        %351 = vperm.xlu0 %350, %v256
        %v352 = vpop.permute.xlu0 %351
        %353 = vset.pattern.permute.xlu0 0
        %354 = vperm.xlu0 %353, %v257
        %v355 = vpop.permute.xlu0 %354
        %vm356 = vcmp.eq.s32.totalorder %v259, %v262
        %vm357 = vcmp.eq.s32.totalorder %v259, %v265
        %vm358 = vcmp.eq.s32.totalorder %v259, %v268
        %vm359 = vcmp.eq.s32.totalorder %v259, %v271
        %vm360 = vcmp.eq.s32.totalorder %v259, %v274
        %vm361 = vcmp.eq.s32.totalorder %v259, %v277
        %vm362 = vcmp.eq.s32.totalorder %v259, %v280
        %vm363 = vcmp.eq.s32.totalorder %v259, %v283
        %vm364 = vcmp.eq.s32.totalorder %v259, %v286
        %vm365 = vcmp.eq.s32.totalorder %v259, %v289
        %vm366 = vcmp.eq.s32.totalorder %v259, %v292
        %vm367 = vcmp.eq.s32.totalorder %v259, %v295
        %vm368 = vcmp.eq.s32.totalorder %v259, %v298
        %vm369 = vcmp.eq.s32.totalorder %v259, %v301
        %vm370 = vcmp.eq.s32.totalorder %v259, %v304
        %vm371 = vcmp.eq.s32.totalorder %v259, %v307
        %vm372 = vcmp.eq.s32.totalorder %v259, %v310
        %vm373 = vcmp.eq.s32.totalorder %v259, %v313
        %vm374 = vcmp.eq.s32.totalorder %v259, %v316
        %vm375 = vcmp.eq.s32.totalorder %v259, %v319
        %vm376 = vcmp.eq.s32.totalorder %v259, %v322
        %vm377 = vcmp.eq.s32.totalorder %v259, %v325
        %vm378 = vcmp.eq.s32.totalorder %v259, %v328
        %vm379 = vcmp.eq.s32.totalorder %v259, %v331
        %vm380 = vcmp.eq.s32.totalorder %v259, %v334
        %vm381 = vcmp.eq.s32.totalorder %v259, %v337
        %vm382 = vcmp.eq.s32.totalorder %v259, %v340
        %vm383 = vcmp.eq.s32.totalorder %v259, %v343
        %vm384 = vcmp.eq.s32.totalorder %v259, %v346
        %vm385 = vcmp.eq.s32.totalorder %v259, %v349
        %vm386 = vcmp.eq.s32.totalorder %v259, %v352
        %vm387 = vcmp.eq.s32.totalorder %v259, %v355
        %v388 = vsel %vm356, 1, 0
        %v389 = vsel %vm357, 1, 0
        %v390 = vsel %vm358, 1, 0
        %v391 = vsel %vm359, 1, 0
        %v392 = vsel %vm360, 1, 0
        %v393 = vsel %vm361, 1, 0
        %v394 = vsel %vm362, 1, 0
        %v395 = vsel %vm363, 1, 0
        %v396 = vsel %vm364, 1, 0
        %v397 = vsel %vm365, 1, 0
        %v398 = vsel %vm366, 1, 0
        %v399 = vsel %vm367, 1, 0
        %v400 = vsel %vm368, 1, 0
        %v401 = vsel %vm369, 1, 0
        %v402 = vsel %vm370, 1, 0
        %v403 = vsel %vm371, 1, 0
        %v404 = vsel %vm372, 1, 0
        %v405 = vsel %vm373, 1, 0
        %v406 = vsel %vm374, 1, 0
        %v407 = vsel %vm375, 1, 0
        %v408 = vsel %vm376, 1, 0
        %v409 = vsel %vm377, 1, 0
        %v410 = vsel %vm378, 1, 0
        %v411 = vsel %vm379, 1, 0
        %v412 = vsel %vm380, 1, 0
        %v413 = vsel %vm381, 1, 0
        %v414 = vsel %vm382, 1, 0
        %v415 = vsel %vm383, 1, 0
        %v416 = vsel %vm384, 1, 0
        %v417 = vsel %vm385, 1, 0
        %v418 = vsel %vm386, 1, 0
        %v419 = vsel %vm387, 1, 0
        %v420 = vcvt.s32.f32 %v388
        %v421 = vcvt.s32.f32 %v389
        %v422 = vcvt.s32.f32 %v390
        %v423 = vcvt.s32.f32 %v391
        %v424 = vcvt.s32.f32 %v392
        %v425 = vcvt.s32.f32 %v393
        %v426 = vcvt.s32.f32 %v394
        %v427 = vcvt.s32.f32 %v395
        %v428 = vcvt.s32.f32 %v396
        %v429 = vcvt.s32.f32 %v397
        %v430 = vcvt.s32.f32 %v398
        %v431 = vcvt.s32.f32 %v399
        %v432 = vcvt.s32.f32 %v400
        %v433 = vcvt.s32.f32 %v401
        %v434 = vcvt.s32.f32 %v402
        %v435 = vcvt.s32.f32 %v403
        %v436 = vcvt.s32.f32 %v404
        %v437 = vcvt.s32.f32 %v405
        %v438 = vcvt.s32.f32 %v406
        %v439 = vcvt.s32.f32 %v407
        %v440 = vcvt.s32.f32 %v408
        %v441 = vcvt.s32.f32 %v409
        %v442 = vcvt.s32.f32 %v410
        %v443 = vcvt.s32.f32 %v411
        %v444 = vcvt.s32.f32 %v412
        %v445 = vcvt.s32.f32 %v413
        %v446 = vcvt.s32.f32 %v414
        %v447 = vcvt.s32.f32 %v415
        %v448 = vcvt.s32.f32 %v416
        %v449 = vcvt.s32.f32 %v417
        %v450 = vcvt.s32.f32 %v418
        %v451 = vcvt.s32.f32 %v419
        %v452 = vld [vmem:[%s194] sm:$0xff]
        %453 = vmatprep.subr.mxu0 0.0
        %454 = vmatpush1.msra.mxu0 %v420
        %455 = vmatprep.subr.mxu0 0.0
        %456 = vmatpush1.msra.mxu0 %v421
        %457 = vmatprep.subr.mxu0 0.0
        %458 = vmatpush1.msra.mxu0 %v422
        %459 = vmatprep.subr.mxu0 0.0
        %460 = vmatpush1.msra.mxu0 %v423
        %461 = vmatprep.subr.mxu0 0.0
        %462 = vmatpush1.msra.mxu0 %v424
        %463 = vmatprep.subr.mxu0 0.0
        %464 = vmatpush1.msra.mxu0 %v425
        %465 = vmatprep.subr.mxu0 0.0
        %466 = vmatpush1.msra.mxu0 %v426
        %467 = vmatprep.subr.mxu0 0.0
        %468 = vmatpush1.msra.mxu0 %v427
        %469 = vmatprep.subr.mxu0 0.0
        %470 = vmatpush1.msra.mxu0 %v428
        %471 = vmatprep.subr.mxu0 0.0
        %472 = vmatpush1.msra.mxu0 %v429
        %473 = vmatprep.subr.mxu0 0.0
        %474 = vmatpush1.msra.mxu0 %v430
        %475 = vmatprep.subr.mxu0 0.0
        %476 = vmatpush1.msra.mxu0 %v431
        %477 = vmatprep.subr.mxu0 0.0
        %478 = vmatpush1.msra.mxu0 %v432
        %479 = vmatprep.subr.mxu0 0.0
        %480 = vmatpush1.msra.mxu0 %v433
        %481 = vmatprep.subr.mxu0 0.0
        %482 = vmatpush1.msra.mxu0 %v434
        %483 = vmatprep.subr.mxu0 0.0
        %484 = vmatpush1.msra.mxu0 %v435
        %485 = vmatprep.subr.mxu0 0.0
        %486 = vmatpush1.msra.mxu0 %v436
        %487 = vmatprep.subr.mxu0 0.0
        %488 = vmatpush1.msra.mxu0 %v437
        %489 = vmatprep.subr.mxu0 0.0
        %490 = vmatpush1.msra.mxu0 %v438
        %491 = vmatprep.subr.mxu0 0.0
        %492 = vmatpush1.msra.mxu0 %v439
        %493 = vmatprep.subr.mxu0 0.0
        %494 = vmatpush1.msra.mxu0 %v440
        %495 = vmatprep.subr.mxu0 0.0
        %496 = vmatpush1.msra.mxu0 %v441
        %497 = vmatprep.subr.mxu0 0.0
        %498 = vmatpush1.msra.mxu0 %v442
        %499 = vmatprep.subr.mxu0 0.0
        %500 = vmatpush1.msra.mxu0 %v443
        %501 = vmatprep.subr.mxu0 0.0
        %502 = vmatpush1.msra.mxu0 %v444
        %503 = vmatprep.subr.mxu0 0.0
        %504 = vmatpush1.msra.mxu0 %v445
        %505 = vmatprep.subr.mxu0 0.0
        %506 = vmatpush1.msra.mxu0 %v446
        %507 = vmatprep.subr.mxu0 0.0
        %508 = vmatpush1.msra.mxu0 %v447
        %509 = vmatprep.subr.mxu0 0.0
        %510 = vmatpush1.msra.mxu0 %v448
        %511 = vmatprep.subr.mxu0 0.0
        %512 = vmatpush1.msra.mxu0 %v449
        %513 = vmatprep.subr.mxu0 0.0
        %514 = vmatpush1.msra.mxu0 %v450
        %515 = vmatprep.subr.mxu0 0.0
        %516 = vmatpush1.msra.mxu0 %v451
        %517 = vmatprep.mubr.f32.mxu0 %v225
        %518 = vmatmul.mubr.f32.gmra.mrb[0].mxu0 %v224
        %v519 = vpop.f32.mrb[0].mxu0
        %v520 = vadd.f32 0.0, %v519
        %v521 = vpop.f32.mrb[0].mxu0
        %522 = vdwg.mxu0
        %v523 = vadd.f32 %v452, %v520
        %524 = vst [vmem:[%s194] sm:$0xff] %v523
        %525 = vset.pattern.permute.xlu0 1
        %526 = vperm.xlu0 %525, %v226
        %v527 = vpop.permute.xlu0 %526
        %528 = vset.pattern.permute.xlu0 1
        %529 = vperm.xlu0 %528, %v227
        %v530 = vpop.permute.xlu0 %529
        %531 = vset.pattern.permute.xlu0 1
        %532 = vperm.xlu0 %531, %v228
        %v533 = vpop.permute.xlu0 %532
        %534 = vset.pattern.permute.xlu0 1
        %535 = vperm.xlu0 %534, %v229
        %v536 = vpop.permute.xlu0 %535
        %537 = vset.pattern.permute.xlu0 1
        %538 = vperm.xlu0 %537, %v230
        %v539 = vpop.permute.xlu0 %538
        %540 = vset.pattern.permute.xlu0 1
        %541 = vperm.xlu0 %540, %v231
        %v542 = vpop.permute.xlu0 %541
        %543 = vset.pattern.permute.xlu0 1
        %544 = vperm.xlu0 %543, %v232
        %v545 = vpop.permute.xlu0 %544
        %546 = vset.pattern.permute.xlu0 1
        %547 = vperm.xlu0 %546, %v233
        %v548 = vpop.permute.xlu0 %547
        %549 = vset.pattern.permute.xlu0 1
        %550 = vperm.xlu0 %549, %v234
        %v551 = vpop.permute.xlu0 %550
        %552 = vset.pattern.permute.xlu0 1
        %553 = vperm.xlu0 %552, %v235
        %v554 = vpop.permute.xlu0 %553
        %555 = vset.pattern.permute.xlu0 1
        %556 = vperm.xlu0 %555, %v236
        %v557 = vpop.permute.xlu0 %556
        %558 = vset.pattern.permute.xlu0 1
        %559 = vperm.xlu0 %558, %v237
        %v560 = vpop.permute.xlu0 %559
        %561 = vset.pattern.permute.xlu0 1
        %562 = vperm.xlu0 %561, %v238
        %v563 = vpop.permute.xlu0 %562
        %564 = vset.pattern.permute.xlu0 1
        %565 = vperm.xlu0 %564, %v239
        %v566 = vpop.permute.xlu0 %565
        %567 = vset.pattern.permute.xlu0 1
        %568 = vperm.xlu0 %567, %v240
        %v569 = vpop.permute.xlu0 %568
        %570 = vset.pattern.permute.xlu0 1
        %571 = vperm.xlu0 %570, %v241
        %v572 = vpop.permute.xlu0 %571
        %573 = vset.pattern.permute.xlu0 1
        %574 = vperm.xlu0 %573, %v242
        %v575 = vpop.permute.xlu0 %574
        %576 = vset.pattern.permute.xlu0 1
        %577 = vperm.xlu0 %576, %v243
        %v578 = vpop.permute.xlu0 %577
        %579 = vset.pattern.permute.xlu0 1
        %580 = vperm.xlu0 %579, %v244
        %v581 = vpop.permute.xlu0 %580
        %582 = vset.pattern.permute.xlu0 1
        %583 = vperm.xlu0 %582, %v245
        %v584 = vpop.permute.xlu0 %583
        %585 = vset.pattern.permute.xlu0 1
        %586 = vperm.xlu0 %585, %v246
        %v587 = vpop.permute.xlu0 %586
        %588 = vset.pattern.permute.xlu0 1
        %589 = vperm.xlu0 %588, %v247
        %v590 = vpop.permute.xlu0 %589
        %591 = vset.pattern.permute.xlu0 1
        %592 = vperm.xlu0 %591, %v248
        %v593 = vpop.permute.xlu0 %592
        %594 = vset.pattern.permute.xlu0 1
        %595 = vperm.xlu0 %594, %v249
        %v596 = vpop.permute.xlu0 %595
        %597 = vset.pattern.permute.xlu0 1
        %598 = vperm.xlu0 %597, %v250
        %v599 = vpop.permute.xlu0 %598
        %600 = vset.pattern.permute.xlu0 1
        %601 = vperm.xlu0 %600, %v251
        %v602 = vpop.permute.xlu0 %601
        %603 = vset.pattern.permute.xlu0 1
        %604 = vperm.xlu0 %603, %v252
        %v605 = vpop.permute.xlu0 %604
        %606 = vset.pattern.permute.xlu0 1
        %607 = vperm.xlu0 %606, %v253
        %v608 = vpop.permute.xlu0 %607
        %609 = vset.pattern.permute.xlu0 1
        %610 = vperm.xlu0 %609, %v254
        %v611 = vpop.permute.xlu0 %610
        %612 = vset.pattern.permute.xlu0 1
        %613 = vperm.xlu0 %612, %v255
        %v614 = vpop.permute.xlu0 %613
        %615 = vset.pattern.permute.xlu0 1
        %616 = vperm.xlu0 %615, %v256
        %v617 = vpop.permute.xlu0 %616
        %618 = vset.pattern.permute.xlu0 1
        %619 = vperm.xlu0 %618, %v257
        %v620 = vpop.permute.xlu0 %619
        %vm621 = vcmp.eq.s32.totalorder %v259, %v527
        %vm622 = vcmp.eq.s32.totalorder %v259, %v530
        %vm623 = vcmp.eq.s32.totalorder %v259, %v533
        %vm624 = vcmp.eq.s32.totalorder %v259, %v536
        %vm625 = vcmp.eq.s32.totalorder %v259, %v539
        %vm626 = vcmp.eq.s32.totalorder %v259, %v542
        %vm627 = vcmp.eq.s32.totalorder %v259, %v545
        %vm628 = vcmp.eq.s32.totalorder %v259, %v548
        %vm629 = vcmp.eq.s32.totalorder %v259, %v551
        %vm630 = vcmp.eq.s32.totalorder %v259, %v554
        %vm631 = vcmp.eq.s32.totalorder %v259, %v557
        %vm632 = vcmp.eq.s32.totalorder %v259, %v560
        %vm633 = vcmp.eq.s32.totalorder %v259, %v563
        %vm634 = vcmp.eq.s32.totalorder %v259, %v566
        %vm635 = vcmp.eq.s32.totalorder %v259, %v569
        %vm636 = vcmp.eq.s32.totalorder %v259, %v572
        %vm637 = vcmp.eq.s32.totalorder %v259, %v575
        %vm638 = vcmp.eq.s32.totalorder %v259, %v578
        %vm639 = vcmp.eq.s32.totalorder %v259, %v581
        %vm640 = vcmp.eq.s32.totalorder %v259, %v584
        %vm641 = vcmp.eq.s32.totalorder %v259, %v587
        %vm642 = vcmp.eq.s32.totalorder %v259, %v590
        %vm643 = vcmp.eq.s32.totalorder %v259, %v593
        %vm644 = vcmp.eq.s32.totalorder %v259, %v596
        %vm645 = vcmp.eq.s32.totalorder %v259, %v599
        %vm646 = vcmp.eq.s32.totalorder %v259, %v602
        %vm647 = vcmp.eq.s32.totalorder %v259, %v605
        %vm648 = vcmp.eq.s32.totalorder %v259, %v608
        %vm649 = vcmp.eq.s32.totalorder %v259, %v611
        %vm650 = vcmp.eq.s32.totalorder %v259, %v614
        %vm651 = vcmp.eq.s32.totalorder %v259, %v617
        %vm652 = vcmp.eq.s32.totalorder %v259, %v620
        %v653 = vsel %vm621, 1, 0
        %v654 = vsel %vm622, 1, 0
        %v655 = vsel %vm623, 1, 0
        %v656 = vsel %vm624, 1, 0
        %v657 = vsel %vm625, 1, 0
        %v658 = vsel %vm626, 1, 0
        %v659 = vsel %vm627, 1, 0
        %v660 = vsel %vm628, 1, 0
        %v661 = vsel %vm629, 1, 0
        %v662 = vsel %vm630, 1, 0
        %v663 = vsel %vm631, 1, 0
        %v664 = vsel %vm632, 1, 0
        %v665 = vsel %vm633, 1, 0
        %v666 = vsel %vm634, 1, 0
        %v667 = vsel %vm635, 1, 0
        %v668 = vsel %vm636, 1, 0
        %v669 = vsel %vm637, 1, 0
        %v670 = vsel %vm638, 1, 0
        %v671 = vsel %vm639, 1, 0
        %v672 = vsel %vm640, 1, 0
        %v673 = vsel %vm641, 1, 0
        %v674 = vsel %vm642, 1, 0
        %v675 = vsel %vm643, 1, 0
        %v676 = vsel %vm644, 1, 0
        %v677 = vsel %vm645, 1, 0
        %v678 = vsel %vm646, 1, 0
        %v679 = vsel %vm647, 1, 0
        %v680 = vsel %vm648, 1, 0
        %v681 = vsel %vm649, 1, 0
        %v682 = vsel %vm650, 1, 0
        %v683 = vsel %vm651, 1, 0
        %v684 = vsel %vm652, 1, 0
        %v685 = vcvt.s32.f32 %v653
        %v686 = vcvt.s32.f32 %v654
        %v687 = vcvt.s32.f32 %v655
        %v688 = vcvt.s32.f32 %v656
        %v689 = vcvt.s32.f32 %v657
        %v690 = vcvt.s32.f32 %v658
        %v691 = vcvt.s32.f32 %v659
        %v692 = vcvt.s32.f32 %v660
        %v693 = vcvt.s32.f32 %v661
        %v694 = vcvt.s32.f32 %v662
        %v695 = vcvt.s32.f32 %v663
        %v696 = vcvt.s32.f32 %v664
        %v697 = vcvt.s32.f32 %v665
        %v698 = vcvt.s32.f32 %v666
        %v699 = vcvt.s32.f32 %v667
        %v700 = vcvt.s32.f32 %v668
        %v701 = vcvt.s32.f32 %v669
        %v702 = vcvt.s32.f32 %v670
        %v703 = vcvt.s32.f32 %v671
        %v704 = vcvt.s32.f32 %v672
        %v705 = vcvt.s32.f32 %v673
        %v706 = vcvt.s32.f32 %v674
        %v707 = vcvt.s32.f32 %v675
        %v708 = vcvt.s32.f32 %v676
        %v709 = vcvt.s32.f32 %v677
        %v710 = vcvt.s32.f32 %v678
        %v711 = vcvt.s32.f32 %v679
        %v712 = vcvt.s32.f32 %v680
        %v713 = vcvt.s32.f32 %v681
        %v714 = vcvt.s32.f32 %v682
        %v715 = vcvt.s32.f32 %v683
        %v716 = vcvt.s32.f32 %v684
        %s717 = scalar_lea.vmem %s194, 8 [#allocation2]
        %v718 = vld [vmem:[%s717] sm:$0xff]
        %719 = vmatprep.subr.mxu0 0.0
        %720 = vmatpush1.msra.mxu0 %v685
        %721 = vmatprep.subr.mxu0 0.0
        %722 = vmatpush1.msra.mxu0 %v686
        %723 = vmatprep.subr.mxu0 0.0
        %724 = vmatpush1.msra.mxu0 %v687
        %725 = vmatprep.subr.mxu0 0.0
        %726 = vmatpush1.msra.mxu0 %v688
        %727 = vmatprep.subr.mxu0 0.0
        %728 = vmatpush1.msra.mxu0 %v689
        %729 = vmatprep.subr.mxu0 0.0
        %730 = vmatpush1.msra.mxu0 %v690
        %731 = vmatprep.subr.mxu0 0.0
        %732 = vmatpush1.msra.mxu0 %v691
        %733 = vmatprep.subr.mxu0 0.0
        %734 = vmatpush1.msra.mxu0 %v692
        %735 = vmatprep.subr.mxu0 0.0
        %736 = vmatpush1.msra.mxu0 %v693
        %737 = vmatprep.subr.mxu0 0.0
        %738 = vmatpush1.msra.mxu0 %v694
        %739 = vmatprep.subr.mxu0 0.0
        %740 = vmatpush1.msra.mxu0 %v695
        %741 = vmatprep.subr.mxu0 0.0
        %742 = vmatpush1.msra.mxu0 %v696
        %743 = vmatprep.subr.mxu0 0.0
        %744 = vmatpush1.msra.mxu0 %v697
        %745 = vmatprep.subr.mxu0 0.0
        %746 = vmatpush1.msra.mxu0 %v698
        %747 = vmatprep.subr.mxu0 0.0
        %748 = vmatpush1.msra.mxu0 %v699
        %749 = vmatprep.subr.mxu0 0.0
        %750 = vmatpush1.msra.mxu0 %v700
        %751 = vmatprep.subr.mxu0 0.0
        %752 = vmatpush1.msra.mxu0 %v701
        %753 = vmatprep.subr.mxu0 0.0
        %754 = vmatpush1.msra.mxu0 %v702
        %755 = vmatprep.subr.mxu0 0.0
        %756 = vmatpush1.msra.mxu0 %v703
        %757 = vmatprep.subr.mxu0 0.0
        %758 = vmatpush1.msra.mxu0 %v704
        %759 = vmatprep.subr.mxu0 0.0
        %760 = vmatpush1.msra.mxu0 %v705
        %761 = vmatprep.subr.mxu0 0.0
        %762 = vmatpush1.msra.mxu0 %v706
        %763 = vmatprep.subr.mxu0 0.0
        %764 = vmatpush1.msra.mxu0 %v707
        %765 = vmatprep.subr.mxu0 0.0
        %766 = vmatpush1.msra.mxu0 %v708
        %767 = vmatprep.subr.mxu0 0.0
        %768 = vmatpush1.msra.mxu0 %v709
        %769 = vmatprep.subr.mxu0 0.0
        %770 = vmatpush1.msra.mxu0 %v710
        %771 = vmatprep.subr.mxu0 0.0
        %772 = vmatpush1.msra.mxu0 %v711
        %773 = vmatprep.subr.mxu0 0.0
        %774 = vmatpush1.msra.mxu0 %v712
        %775 = vmatprep.subr.mxu0 0.0
        %776 = vmatpush1.msra.mxu0 %v713
        %777 = vmatprep.subr.mxu0 0.0
        %778 = vmatpush1.msra.mxu0 %v714
        %779 = vmatprep.subr.mxu0 0.0
        %780 = vmatpush1.msra.mxu0 %v715
        %781 = vmatprep.subr.mxu0 0.0
        %782 = vmatpush1.msra.mxu0 %v716
        %783 = vmatprep.mubr.f32.mxu0 %v225
        %784 = vmatmul.mubr.f32.gmra.mrb[0].mxu0 %v224
        %v785 = vpop.f32.mrb[0].mxu0
        %v786 = vadd.f32 0.0, %v785
        %v787 = vpop.f32.mrb[0].mxu0
        %788 = vdwg.mxu0
        %v789 = vadd.f32 %v718, %v786
        %790 = vst [vmem:[%s717] sm:$0xff] %v789
        %791 = vset.pattern.permute.xlu0 2
        %792 = vperm.xlu0 %791, %v226
        %v793 = vpop.permute.xlu0 %792
        %794 = vset.pattern.permute.xlu0 2
        %795 = vperm.xlu0 %794, %v227
        %v796 = vpop.permute.xlu0 %795
        %797 = vset.pattern.permute.xlu0 2
        %798 = vperm.xlu0 %797, %v228
        %v799 = vpop.permute.xlu0 %798
        %800 = vset.pattern.permute.xlu0 2
        %801 = vperm.xlu0 %800, %v229
        %v802 = vpop.permute.xlu0 %801
        %803 = vset.pattern.permute.xlu0 2
        %804 = vperm.xlu0 %803, %v230
        %v805 = vpop.permute.xlu0 %804
        %806 = vset.pattern.permute.xlu0 2
        %807 = vperm.xlu0 %806, %v231
        %v808 = vpop.permute.xlu0 %807
        %809 = vset.pattern.permute.xlu0 2
        %810 = vperm.xlu0 %809, %v232
        %v811 = vpop.permute.xlu0 %810
        %812 = vset.pattern.permute.xlu0 2
        %813 = vperm.xlu0 %812, %v233
        %v814 = vpop.permute.xlu0 %813
        %815 = vset.pattern.permute.xlu0 2
        %816 = vperm.xlu0 %815, %v234
        %v817 = vpop.permute.xlu0 %816
        %818 = vset.pattern.permute.xlu0 2
        %819 = vperm.xlu0 %818, %v235
        %v820 = vpop.permute.xlu0 %819
        %821 = vset.pattern.permute.xlu0 2
        %822 = vperm.xlu0 %821, %v236
        %v823 = vpop.permute.xlu0 %822
        %824 = vset.pattern.permute.xlu0 2
        %825 = vperm.xlu0 %824, %v237
        %v826 = vpop.permute.xlu0 %825
        %827 = vset.pattern.permute.xlu0 2
        %828 = vperm.xlu0 %827, %v238
        %v829 = vpop.permute.xlu0 %828
        %830 = vset.pattern.permute.xlu0 2
        %831 = vperm.xlu0 %830, %v239
        %v832 = vpop.permute.xlu0 %831
        %833 = vset.pattern.permute.xlu0 2
        %834 = vperm.xlu0 %833, %v240
        %v835 = vpop.permute.xlu0 %834
        %836 = vset.pattern.permute.xlu0 2
        %837 = vperm.xlu0 %836, %v241
        %v838 = vpop.permute.xlu0 %837
        %839 = vset.pattern.permute.xlu0 2
        %840 = vperm.xlu0 %839, %v242
        %v841 = vpop.permute.xlu0 %840
        %842 = vset.pattern.permute.xlu0 2
        %843 = vperm.xlu0 %842, %v243
        %v844 = vpop.permute.xlu0 %843
        %845 = vset.pattern.permute.xlu0 2
        %846 = vperm.xlu0 %845, %v244
        %v847 = vpop.permute.xlu0 %846
        %848 = vset.pattern.permute.xlu0 2
        %849 = vperm.xlu0 %848, %v245
        %v850 = vpop.permute.xlu0 %849
        %851 = vset.pattern.permute.xlu0 2
        %852 = vperm.xlu0 %851, %v246
        %v853 = vpop.permute.xlu0 %852
        %854 = vset.pattern.permute.xlu0 2
        %855 = vperm.xlu0 %854, %v247
        %v856 = vpop.permute.xlu0 %855
        %857 = vset.pattern.permute.xlu0 2
        %858 = vperm.xlu0 %857, %v248
        %v859 = vpop.permute.xlu0 %858
        %860 = vset.pattern.permute.xlu0 2
        %861 = vperm.xlu0 %860, %v249
        %v862 = vpop.permute.xlu0 %861
        %863 = vset.pattern.permute.xlu0 2
        %864 = vperm.xlu0 %863, %v250
        %v865 = vpop.permute.xlu0 %864
        %866 = vset.pattern.permute.xlu0 2
        %867 = vperm.xlu0 %866, %v251
        %v868 = vpop.permute.xlu0 %867
        %869 = vset.pattern.permute.xlu0 2
        %870 = vperm.xlu0 %869, %v252
        %v871 = vpop.permute.xlu0 %870
        %872 = vset.pattern.permute.xlu0 2
        %873 = vperm.xlu0 %872, %v253
        %v874 = vpop.permute.xlu0 %873
        %875 = vset.pattern.permute.xlu0 2
        %876 = vperm.xlu0 %875, %v254
        %v877 = vpop.permute.xlu0 %876
        %878 = vset.pattern.permute.xlu0 2
        %879 = vperm.xlu0 %878, %v255
        %v880 = vpop.permute.xlu0 %879
        %881 = vset.pattern.permute.xlu0 2
        %882 = vperm.xlu0 %881, %v256
        %v883 = vpop.permute.xlu0 %882
        %884 = vset.pattern.permute.xlu0 2
        %885 = vperm.xlu0 %884, %v257
        %v886 = vpop.permute.xlu0 %885
        %vm887 = vcmp.eq.s32.totalorder %v259, %v793
        %vm888 = vcmp.eq.s32.totalorder %v259, %v796
        %vm889 = vcmp.eq.s32.totalorder %v259, %v799
        %vm890 = vcmp.eq.s32.totalorder %v259, %v802
        %vm891 = vcmp.eq.s32.totalorder %v259, %v805
        %vm892 = vcmp.eq.s32.totalorder %v259, %v808
        %vm893 = vcmp.eq.s32.totalorder %v259, %v811
        %vm894 = vcmp.eq.s32.totalorder %v259, %v814
        %vm895 = vcmp.eq.s32.totalorder %v259, %v817
        %vm896 = vcmp.eq.s32.totalorder %v259, %v820
        %vm897 = vcmp.eq.s32.totalorder %v259, %v823
        %vm898 = vcmp.eq.s32.totalorder %v259, %v826
        %vm899 = vcmp.eq.s32.totalorder %v259, %v829
        %vm900 = vcmp.eq.s32.totalorder %v259, %v832
        %vm901 = vcmp.eq.s32.totalorder %v259, %v835
        %vm902 = vcmp.eq.s32.totalorder %v259, %v838
        %vm903 = vcmp.eq.s32.totalorder %v259, %v841
        %vm904 = vcmp.eq.s32.totalorder %v259, %v844
        %vm905 = vcmp.eq.s32.totalorder %v259, %v847
        %vm906 = vcmp.eq.s32.totalorder %v259, %v850
        %vm907 = vcmp.eq.s32.totalorder %v259, %v853
        %vm908 = vcmp.eq.s32.totalorder %v259, %v856
        %vm909 = vcmp.eq.s32.totalorder %v259, %v859
        %vm910 = vcmp.eq.s32.totalorder %v259, %v862
        %vm911 = vcmp.eq.s32.totalorder %v259, %v865
        %vm912 = vcmp.eq.s32.totalorder %v259, %v868
        %vm913 = vcmp.eq.s32.totalorder %v259, %v871
        %vm914 = vcmp.eq.s32.totalorder %v259, %v874
        %vm915 = vcmp.eq.s32.totalorder %v259, %v877
        %vm916 = vcmp.eq.s32.totalorder %v259, %v880
        %vm917 = vcmp.eq.s32.totalorder %v259, %v883
        %vm918 = vcmp.eq.s32.totalorder %v259, %v886
        %v919 = vsel %vm887, 1, 0
        %v920 = vsel %vm888, 1, 0
        %v921 = vsel %vm889, 1, 0
        %v922 = vsel %vm890, 1, 0
        %v923 = vsel %vm891, 1, 0
        %v924 = vsel %vm892, 1, 0
        %v925 = vsel %vm893, 1, 0
        %v926 = vsel %vm894, 1, 0
        %v927 = vsel %vm895, 1, 0
        %v928 = vsel %vm896, 1, 0
        %v929 = vsel %vm897, 1, 0
        %v930 = vsel %vm898, 1, 0
        %v931 = vsel %vm899, 1, 0
        %v932 = vsel %vm900, 1, 0
        %v933 = vsel %vm901, 1, 0
        %v934 = vsel %vm902, 1, 0
        %v935 = vsel %vm903, 1, 0
        %v936 = vsel %vm904, 1, 0
        %v937 = vsel %vm905, 1, 0
        %v938 = vsel %vm906, 1, 0
        %v939 = vsel %vm907, 1, 0
        %v940 = vsel %vm908, 1, 0
        %v941 = vsel %vm909, 1, 0
        %v942 = vsel %vm910, 1, 0
        %v943 = vsel %vm911, 1, 0
        %v944 = vsel %vm912, 1, 0
        %v945 = vsel %vm913, 1, 0
        %v946 = vsel %vm914, 1, 0
        %v947 = vsel %vm915, 1, 0
        %v948 = vsel %vm916, 1, 0
        %v949 = vsel %vm917, 1, 0
        %v950 = vsel %vm918, 1, 0
        %v951 = vcvt.s32.f32 %v919
        %v952 = vcvt.s32.f32 %v920
        %v953 = vcvt.s32.f32 %v921
        %v954 = vcvt.s32.f32 %v922
        %v955 = vcvt.s32.f32 %v923
        %v956 = vcvt.s32.f32 %v924
        %v957 = vcvt.s32.f32 %v925
        %v958 = vcvt.s32.f32 %v926
        %v959 = vcvt.s32.f32 %v927
        %v960 = vcvt.s32.f32 %v928
        %v961 = vcvt.s32.f32 %v929
        %v962 = vcvt.s32.f32 %v930
        %v963 = vcvt.s32.f32 %v931
        %v964 = vcvt.s32.f32 %v932
        %v965 = vcvt.s32.f32 %v933
        %v966 = vcvt.s32.f32 %v934
        %v967 = vcvt.s32.f32 %v935
        %v968 = vcvt.s32.f32 %v936
        %v969 = vcvt.s32.f32 %v937
        %v970 = vcvt.s32.f32 %v938
        %v971 = vcvt.s32.f32 %v939
        %v972 = vcvt.s32.f32 %v940
        %v973 = vcvt.s32.f32 %v941
        %v974 = vcvt.s32.f32 %v942
        %v975 = vcvt.s32.f32 %v943
        %v976 = vcvt.s32.f32 %v944
        %v977 = vcvt.s32.f32 %v945
        %v978 = vcvt.s32.f32 %v946
        %v979 = vcvt.s32.f32 %v947
        %v980 = vcvt.s32.f32 %v948
        %v981 = vcvt.s32.f32 %v949
        %v982 = vcvt.s32.f32 %v950
        %s983 = scalar_lea.vmem %s194, 16 [#allocation2]
        %v984 = vld [vmem:[%s983] sm:$0xff]
        %985 = vmatprep.subr.mxu0 0.0
        %986 = vmatpush1.msra.mxu0 %v951
        %987 = vmatprep.subr.mxu0 0.0
        %988 = vmatpush1.msra.mxu0 %v952
        %989 = vmatprep.subr.mxu0 0.0
        %990 = vmatpush1.msra.mxu0 %v953
        %991 = vmatprep.subr.mxu0 0.0
        %992 = vmatpush1.msra.mxu0 %v954
        %993 = vmatprep.subr.mxu0 0.0
        %994 = vmatpush1.msra.mxu0 %v955
        %995 = vmatprep.subr.mxu0 0.0
        %996 = vmatpush1.msra.mxu0 %v956
        %997 = vmatprep.subr.mxu0 0.0
        %998 = vmatpush1.msra.mxu0 %v957
        %999 = vmatprep.subr.mxu0 0.0
        %1000 = vmatpush1.msra.mxu0 %v958
        %1001 = vmatprep.subr.mxu0 0.0
        %1002 = vmatpush1.msra.mxu0 %v959
        %1003 = vmatprep.subr.mxu0 0.0
        %1004 = vmatpush1.msra.mxu0 %v960
        %1005 = vmatprep.subr.mxu0 0.0
        %1006 = vmatpush1.msra.mxu0 %v961
        %1007 = vmatprep.subr.mxu0 0.0
        %1008 = vmatpush1.msra.mxu0 %v962
        %1009 = vmatprep.subr.mxu0 0.0
        %1010 = vmatpush1.msra.mxu0 %v963
        %1011 = vmatprep.subr.mxu0 0.0
        %1012 = vmatpush1.msra.mxu0 %v964
        %1013 = vmatprep.subr.mxu0 0.0
        %1014 = vmatpush1.msra.mxu0 %v965
        %1015 = vmatprep.subr.mxu0 0.0
        %1016 = vmatpush1.msra.mxu0 %v966
        %1017 = vmatprep.subr.mxu0 0.0
        %1018 = vmatpush1.msra.mxu0 %v967
        %1019 = vmatprep.subr.mxu0 0.0
        %1020 = vmatpush1.msra.mxu0 %v968
        %1021 = vmatprep.subr.mxu0 0.0
        %1022 = vmatpush1.msra.mxu0 %v969
        %1023 = vmatprep.subr.mxu0 0.0
        %1024 = vmatpush1.msra.mxu0 %v970
        %1025 = vmatprep.subr.mxu0 0.0
        %1026 = vmatpush1.msra.mxu0 %v971
        %1027 = vmatprep.subr.mxu0 0.0
        %1028 = vmatpush1.msra.mxu0 %v972
        %1029 = vmatprep.subr.mxu0 0.0
        %1030 = vmatpush1.msra.mxu0 %v973
        %1031 = vmatprep.subr.mxu0 0.0
        %1032 = vmatpush1.msra.mxu0 %v974
        %1033 = vmatprep.subr.mxu0 0.0
        %1034 = vmatpush1.msra.mxu0 %v975
        %1035 = vmatprep.subr.mxu0 0.0
        %1036 = vmatpush1.msra.mxu0 %v976
        %1037 = vmatprep.subr.mxu0 0.0
        %1038 = vmatpush1.msra.mxu0 %v977
        %1039 = vmatprep.subr.mxu0 0.0
        %1040 = vmatpush1.msra.mxu0 %v978
        %1041 = vmatprep.subr.mxu0 0.0
        %1042 = vmatpush1.msra.mxu0 %v979
        %1043 = vmatprep.subr.mxu0 0.0
        %1044 = vmatpush1.msra.mxu0 %v980
        %1045 = vmatprep.subr.mxu0 0.0
        %1046 = vmatpush1.msra.mxu0 %v981
        %1047 = vmatprep.subr.mxu0 0.0
        %1048 = vmatpush1.msra.mxu0 %v982
        %1049 = vmatprep.mubr.f32.mxu0 %v225
        %1050 = vmatmul.mubr.f32.gmra.mrb[0].mxu0 %v224
        %v1051 = vpop.f32.mrb[0].mxu0
        %v1052 = vadd.f32 0.0, %v1051
        %v1053 = vpop.f32.mrb[0].mxu0
        %1054 = vdwg.mxu0
        %v1055 = vadd.f32 %v984, %v1052
        %1056 = vst [vmem:[%s983] sm:$0xff] %v1055
        %1057 = vset.pattern.permute.xlu0 3
        %1058 = vperm.xlu0 %1057, %v226
        %v1059 = vpop.permute.xlu0 %1058
        %1060 = vset.pattern.permute.xlu0 3
        %1061 = vperm.xlu0 %1060, %v227
        %v1062 = vpop.permute.xlu0 %1061
        %1063 = vset.pattern.permute.xlu0 3
        %1064 = vperm.xlu0 %1063, %v228
        %v1065 = vpop.permute.xlu0 %1064
        %1066 = vset.pattern.permute.xlu0 3
        %1067 = vperm.xlu0 %1066, %v229
        %v1068 = vpop.permute.xlu0 %1067
        %1069 = vset.pattern.permute.xlu0 3
        %1070 = vperm.xlu0 %1069, %v230
        %v1071 = vpop.permute.xlu0 %1070
        %1072 = vset.pattern.permute.xlu0 3
        %1073 = vperm.xlu0 %1072, %v231
        %v1074 = vpop.permute.xlu0 %1073
        %1075 = vset.pattern.permute.xlu0 3
        %1076 = vperm.xlu0 %1075, %v232
        %v1077 = vpop.permute.xlu0 %1076
        %1078 = vset.pattern.permute.xlu0 3
        %1079 = vperm.xlu0 %1078, %v233
        %v1080 = vpop.permute.xlu0 %1079
        %1081 = vset.pattern.permute.xlu0 3
        %1082 = vperm.xlu0 %1081, %v234
        %v1083 = vpop.permute.xlu0 %1082
        %1084 = vset.pattern.permute.xlu0 3
        %1085 = vperm.xlu0 %1084, %v235
        %v1086 = vpop.permute.xlu0 %1085
        %1087 = vset.pattern.permute.xlu0 3
        %1088 = vperm.xlu0 %1087, %v236
        %v1089 = vpop.permute.xlu0 %1088
        %1090 = vset.pattern.permute.xlu0 3
        %1091 = vperm.xlu0 %1090, %v237
        %v1092 = vpop.permute.xlu0 %1091
        %1093 = vset.pattern.permute.xlu0 3
        %1094 = vperm.xlu0 %1093, %v238
        %v1095 = vpop.permute.xlu0 %1094
        %1096 = vset.pattern.permute.xlu0 3
        %1097 = vperm.xlu0 %1096, %v239
        %v1098 = vpop.permute.xlu0 %1097
        %1099 = vset.pattern.permute.xlu0 3
        %1100 = vperm.xlu0 %1099, %v240
        %v1101 = vpop.permute.xlu0 %1100
        %1102 = vset.pattern.permute.xlu0 3
        %1103 = vperm.xlu0 %1102, %v241
        %v1104 = vpop.permute.xlu0 %1103
        %1105 = vset.pattern.permute.xlu0 3
        %1106 = vperm.xlu0 %1105, %v242
        %v1107 = vpop.permute.xlu0 %1106
        %1108 = vset.pattern.permute.xlu0 3
        %1109 = vperm.xlu0 %1108, %v243
        %v1110 = vpop.permute.xlu0 %1109
        %1111 = vset.pattern.permute.xlu0 3
        %1112 = vperm.xlu0 %1111, %v244
        %v1113 = vpop.permute.xlu0 %1112
        %1114 = vset.pattern.permute.xlu0 3
        %1115 = vperm.xlu0 %1114, %v245
        %v1116 = vpop.permute.xlu0 %1115
        %1117 = vset.pattern.permute.xlu0 3
        %1118 = vperm.xlu0 %1117, %v246
        %v1119 = vpop.permute.xlu0 %1118
        %1120 = vset.pattern.permute.xlu0 3
        %1121 = vperm.xlu0 %1120, %v247
        %v1122 = vpop.permute.xlu0 %1121
        %1123 = vset.pattern.permute.xlu0 3
        %1124 = vperm.xlu0 %1123, %v248
        %v1125 = vpop.permute.xlu0 %1124
        %1126 = vset.pattern.permute.xlu0 3
        %1127 = vperm.xlu0 %1126, %v249
        %v1128 = vpop.permute.xlu0 %1127
        %1129 = vset.pattern.permute.xlu0 3
        %1130 = vperm.xlu0 %1129, %v250
        %v1131 = vpop.permute.xlu0 %1130
        %1132 = vset.pattern.permute.xlu0 3
        %1133 = vperm.xlu0 %1132, %v251
        %v1134 = vpop.permute.xlu0 %1133
        %1135 = vset.pattern.permute.xlu0 3
        %1136 = vperm.xlu0 %1135, %v252
        %v1137 = vpop.permute.xlu0 %1136
        %1138 = vset.pattern.permute.xlu0 3
        %1139 = vperm.xlu0 %1138, %v253
        %v1140 = vpop.permute.xlu0 %1139
        %1141 = vset.pattern.permute.xlu0 3
        %1142 = vperm.xlu0 %1141, %v254
        %v1143 = vpop.permute.xlu0 %1142
        %1144 = vset.pattern.permute.xlu0 3
        %1145 = vperm.xlu0 %1144, %v255
        %v1146 = vpop.permute.xlu0 %1145
        %1147 = vset.pattern.permute.xlu0 3
        %1148 = vperm.xlu0 %1147, %v256
        %v1149 = vpop.permute.xlu0 %1148
        %1150 = vset.pattern.permute.xlu0 3
        %1151 = vperm.xlu0 %1150, %v257
        %v1152 = vpop.permute.xlu0 %1151
        %vm1153 = vcmp.eq.s32.totalorder %v259, %v1059
        %vm1154 = vcmp.eq.s32.totalorder %v259, %v1062
        %vm1155 = vcmp.eq.s32.totalorder %v259, %v1065
        %vm1156 = vcmp.eq.s32.totalorder %v259, %v1068
        %vm1157 = vcmp.eq.s32.totalorder %v259, %v1071
        %vm1158 = vcmp.eq.s32.totalorder %v259, %v1074
        %vm1159 = vcmp.eq.s32.totalorder %v259, %v1077
        %vm1160 = vcmp.eq.s32.totalorder %v259, %v1080
        %vm1161 = vcmp.eq.s32.totalorder %v259, %v1083
        %vm1162 = vcmp.eq.s32.totalorder %v259, %v1086
        %vm1163 = vcmp.eq.s32.totalorder %v259, %v1089
        %vm1164 = vcmp.eq.s32.totalorder %v259, %v1092
        %vm1165 = vcmp.eq.s32.totalorder %v259, %v1095
        %vm1166 = vcmp.eq.s32.totalorder %v259, %v1098
        %vm1167 = vcmp.eq.s32.totalorder %v259, %v1101
        %vm1168 = vcmp.eq.s32.totalorder %v259, %v1104
        %vm1169 = vcmp.eq.s32.totalorder %v259, %v1107
        %vm1170 = vcmp.eq.s32.totalorder %v259, %v1110
        %vm1171 = vcmp.eq.s32.totalorder %v259, %v1113
        %vm1172 = vcmp.eq.s32.totalorder %v259, %v1116
        %vm1173 = vcmp.eq.s32.totalorder %v259, %v1119
        %vm1174 = vcmp.eq.s32.totalorder %v259, %v1122
        %vm1175 = vcmp.eq.s32.totalorder %v259, %v1125
        %vm1176 = vcmp.eq.s32.totalorder %v259, %v1128
        %vm1177 = vcmp.eq.s32.totalorder %v259, %v1131
        %vm1178 = vcmp.eq.s32.totalorder %v259, %v1134
        %vm1179 = vcmp.eq.s32.totalorder %v259, %v1137
        %vm1180 = vcmp.eq.s32.totalorder %v259, %v1140
        %vm1181 = vcmp.eq.s32.totalorder %v259, %v1143
        %vm1182 = vcmp.eq.s32.totalorder %v259, %v1146
        %vm1183 = vcmp.eq.s32.totalorder %v259, %v1149
        %vm1184 = vcmp.eq.s32.totalorder %v259, %v1152
        %v1185 = vsel %vm1153, 1, 0
        %v1186 = vsel %vm1154, 1, 0
        %v1187 = vsel %vm1155, 1, 0
        %v1188 = vsel %vm1156, 1, 0
        %v1189 = vsel %vm1157, 1, 0
        %v1190 = vsel %vm1158, 1, 0
        %v1191 = vsel %vm1159, 1, 0
        %v1192 = vsel %vm1160, 1, 0
        %v1193 = vsel %vm1161, 1, 0
        %v1194 = vsel %vm1162, 1, 0
        %v1195 = vsel %vm1163, 1, 0
        %v1196 = vsel %vm1164, 1, 0
        %v1197 = vsel %vm1165, 1, 0
        %v1198 = vsel %vm1166, 1, 0
        %v1199 = vsel %vm1167, 1, 0
        %v1200 = vsel %vm1168, 1, 0
        %v1201 = vsel %vm1169, 1, 0
        %v1202 = vsel %vm1170, 1, 0
        %v1203 = vsel %vm1171, 1, 0
        %v1204 = vsel %vm1172, 1, 0
        %v1205 = vsel %vm1173, 1, 0
        %v1206 = vsel %vm1174, 1, 0
        %v1207 = vsel %vm1175, 1, 0
        %v1208 = vsel %vm1176, 1, 0
        %v1209 = vsel %vm1177, 1, 0
        %v1210 = vsel %vm1178, 1, 0
        %v1211 = vsel %vm1179, 1, 0
        %v1212 = vsel %vm1180, 1, 0
        %v1213 = vsel %vm1181, 1, 0
        %v1214 = vsel %vm1182, 1, 0
        %v1215 = vsel %vm1183, 1, 0
        %v1216 = vsel %vm1184, 1, 0
        %v1217 = vcvt.s32.f32 %v1185
        %v1218 = vcvt.s32.f32 %v1186
        %v1219 = vcvt.s32.f32 %v1187
        %v1220 = vcvt.s32.f32 %v1188
        %v1221 = vcvt.s32.f32 %v1189
        %v1222 = vcvt.s32.f32 %v1190
        %v1223 = vcvt.s32.f32 %v1191
        %v1224 = vcvt.s32.f32 %v1192
        %v1225 = vcvt.s32.f32 %v1193
        %v1226 = vcvt.s32.f32 %v1194
        %v1227 = vcvt.s32.f32 %v1195
        %v1228 = vcvt.s32.f32 %v1196
        %v1229 = vcvt.s32.f32 %v1197
        %v1230 = vcvt.s32.f32 %v1198
        %v1231 = vcvt.s32.f32 %v1199
        %v1232 = vcvt.s32.f32 %v1200
        %v1233 = vcvt.s32.f32 %v1201
        %v1234 = vcvt.s32.f32 %v1202
        %v1235 = vcvt.s32.f32 %v1203
        %v1236 = vcvt.s32.f32 %v1204
        %v1237 = vcvt.s32.f32 %v1205
        %v1238 = vcvt.s32.f32 %v1206
        %v1239 = vcvt.s32.f32 %v1207
        %v1240 = vcvt.s32.f32 %v1208
        %v1241 = vcvt.s32.f32 %v1209
        %v1242 = vcvt.s32.f32 %v1210
        %v1243 = vcvt.s32.f32 %v1211
        %v1244 = vcvt.s32.f32 %v1212
        %v1245 = vcvt.s32.f32 %v1213
        %v1246 = vcvt.s32.f32 %v1214
        %v1247 = vcvt.s32.f32 %v1215
        %v1248 = vcvt.s32.f32 %v1216
        %s1249 = scalar_lea.vmem %s194, 24 [#allocation2]
        %v1250 = vld [vmem:[%s1249] sm:$0xff]
        %1251 = vmatprep.subr.mxu0 0.0
        %1252 = vmatpush1.msra.mxu0 %v1217
        %1253 = vmatprep.subr.mxu0 0.0
        %1254 = vmatpush1.msra.mxu0 %v1218
        %1255 = vmatprep.subr.mxu0 0.0
        %1256 = vmatpush1.msra.mxu0 %v1219
        %1257 = vmatprep.subr.mxu0 0.0
        %1258 = vmatpush1.msra.mxu0 %v1220
        %1259 = vmatprep.subr.mxu0 0.0
        %1260 = vmatpush1.msra.mxu0 %v1221
        %1261 = vmatprep.subr.mxu0 0.0
        %1262 = vmatpush1.msra.mxu0 %v1222
        %1263 = vmatprep.subr.mxu0 0.0
        %1264 = vmatpush1.msra.mxu0 %v1223
        %1265 = vmatprep.subr.mxu0 0.0
        %1266 = vmatpush1.msra.mxu0 %v1224
        %1267 = vmatprep.subr.mxu0 0.0
        %1268 = vmatpush1.msra.mxu0 %v1225
        %1269 = vmatprep.subr.mxu0 0.0
        %1270 = vmatpush1.msra.mxu0 %v1226
        %1271 = vmatprep.subr.mxu0 0.0
        %1272 = vmatpush1.msra.mxu0 %v1227
        %1273 = vmatprep.subr.mxu0 0.0
        %1274 = vmatpush1.msra.mxu0 %v1228
        %1275 = vmatprep.subr.mxu0 0.0
        %1276 = vmatpush1.msra.mxu0 %v1229
        %1277 = vmatprep.subr.mxu0 0.0
        %1278 = vmatpush1.msra.mxu0 %v1230
        %1279 = vmatprep.subr.mxu0 0.0
        %1280 = vmatpush1.msra.mxu0 %v1231
        %1281 = vmatprep.subr.mxu0 0.0
        %1282 = vmatpush1.msra.mxu0 %v1232
        %1283 = vmatprep.subr.mxu0 0.0
        %1284 = vmatpush1.msra.mxu0 %v1233
        %1285 = vmatprep.subr.mxu0 0.0
        %1286 = vmatpush1.msra.mxu0 %v1234
        %1287 = vmatprep.subr.mxu0 0.0
        %1288 = vmatpush1.msra.mxu0 %v1235
        %1289 = vmatprep.subr.mxu0 0.0
        %1290 = vmatpush1.msra.mxu0 %v1236
        %1291 = vmatprep.subr.mxu0 0.0
        %1292 = vmatpush1.msra.mxu0 %v1237
        %1293 = vmatprep.subr.mxu0 0.0
        %1294 = vmatpush1.msra.mxu0 %v1238
        %1295 = vmatprep.subr.mxu0 0.0
        %1296 = vmatpush1.msra.mxu0 %v1239
        %1297 = vmatprep.subr.mxu0 0.0
        %1298 = vmatpush1.msra.mxu0 %v1240
        %1299 = vmatprep.subr.mxu0 0.0
        %1300 = vmatpush1.msra.mxu0 %v1241
        %1301 = vmatprep.subr.mxu0 0.0
        %1302 = vmatpush1.msra.mxu0 %v1242
        %1303 = vmatprep.subr.mxu0 0.0
        %1304 = vmatpush1.msra.mxu0 %v1243
        %1305 = vmatprep.subr.mxu0 0.0
        %1306 = vmatpush1.msra.mxu0 %v1244
        %1307 = vmatprep.subr.mxu0 0.0
        %1308 = vmatpush1.msra.mxu0 %v1245
        %1309 = vmatprep.subr.mxu0 0.0
        %1310 = vmatpush1.msra.mxu0 %v1246
        %1311 = vmatprep.subr.mxu0 0.0
        %1312 = vmatpush1.msra.mxu0 %v1247
        %1313 = vmatprep.subr.mxu0 0.0
        %1314 = vmatpush1.msra.mxu0 %v1248
        %1315 = vmatprep.mubr.f32.mxu0 %v225
        %1316 = vmatmul.mubr.f32.gmra.mrb[0].mxu0 %v224
        %v1317 = vpop.f32.mrb[0].mxu0
        %v1318 = vadd.f32 0.0, %v1317
        %v1319 = vpop.f32.mrb[0].mxu0
        %1320 = vdwg.mxu0
        %v1321 = vadd.f32 %v1250, %v1318
        %1322 = vst [vmem:[%s1249] sm:$0xff] %v1321
        %s1323 = sand.u32 %s101, 1
        %s1324 = scalar_lea.sflag [#allocation3], %s1323
        %s1325 = sand.u32 %s101, 1
        %s1326 = smul.addr %s1325, 32
        %s1327 = scalar_lea.vmem [#allocation2], %s1326
        // Predicated region
        $region33: #{tpu_custom_call.1} parent=27 // pred_check
          %p1328 = pneg %p111
        $region34: #{tpu_custom_call.1} parent=27 // pred_check_branch
          %1330 = sbr.rel (%p1328) target = $region36
        $region35: #{tpu_custom_call.1} parent=27 // pred_region
          %s1331 = smul.u32 4, %s22
          %s1333 = ssub.s32 512, 512
          %1334 = vsyncadd %s1324, %s1333
          %s1335 = sadd.s32 %s21, %s1331
          %s1336 = smul.addr %s1335, 128
          %s1337 = scalar_lea.hbm %s2, %s1336
          %s1338 = sshll.u32 %s1327, 4
          %s1339 = int_to_ptr.vmem [resolvable:$true] %s1338
          %1344 = dma.vmem_to_hbm [thread:$0]  %s1339, 512, %s1337, %s1324, 128, 128, 8
        $region36: #{tpu_custom_call.1} parent=27 // pred_fallthru
          _
      $region28: #{tpu_custom_call.1} parent=5 // pred_fallthru
        _
      %p1345 = scmp.le.s32.totalorder 2, %s11
      // Predicated region
      $region37: #{tpu_custom_call.1} parent=5 // pred_check
        %p1346 = pneg %p1345
      $region38: #{tpu_custom_call.1} parent=5 // pred_check_branch
        %1348 = sbr.rel (%p1346) target = $region40
      $region39: #{tpu_custom_call.1} parent=5 // pred_region
        %s1349 = ssub.s32 %s11, 2
        // Predicated region
        $region41: #{tpu_custom_call.1} parent=39 // pred_check
          %p1350 = pneg %p117
        $region42: #{tpu_custom_call.1} parent=39 // pred_check_branch
          %1352 = sbr.rel (%p1350) target = $region44
        $region43: #{tpu_custom_call.1} parent=39 // pred_region
          %s1353 = sand.u32 %s102, 1
          %s1354 = scalar_lea.sflag [#allocation3], %s1353
          %s1355 = sand.u32 %s102, 1
          %s1356 = smul.addr %s1355, 32
          %s1357 = scalar_lea.vmem [#allocation2], %s1356
          %1358 = dma.done %s1354, 512
        $region44: #{tpu_custom_call.1} parent=39 // pred_fallthru
          _
      $region40: #{tpu_custom_call.1} parent=5 // pred_fallthru
        _
    $region6: #{tpu_custom_call.1} parent=1 // loop_footer
      %s15 = sadd.s32 1, %s11
    $region7: #{tpu_custom_call.1} parent=1 // loop_footer_branch
      %10 = sbr.rel target = $region3
    $region8: #{tpu_custom_call.1} parent=1 // loop_exit
      _
    %1359 = vsyncpa [#allocation3], 1
    %s1360 = scalar_lea.sflag [#allocation3], 1
    %1361 = vsyncpa %s1360, 1

</llo_original>
